<compile_context>
chip_gen: v5e
topology: v5e:2x2
jax: 0.10.0
libtpu: 0.0.40
codegen_flags: <defaults>
</compile_context>

<pallas_src>
import functools
import math

import jax
import jax.numpy as jnp
from jax import lax
from jax.experimental import pallas as pl
from jax.experimental.pallas import tpu as pltpu


# ----------------------------- helpers -----------------------------

def _round_up(x, m):
    return ((x + m - 1) // m) * m


def _row_tile(m, cap):
    """Largest power-of-two row tile <= cap that keeps >=2 grid steps when
    possible (megacore on v7x); falls back to a full (8-aligned) block for tiny M."""
    t = cap
    while t >= 256 and m < 2 * t:
        t //= 2
    if m >= t:
        return t
    return _round_up(max(m, 1), 8)


# ----------------------------- dense (matmul + bias + act) -----------------------------

def _dense_kernel(x_ref, w_ref, b_ref, o_ref, *, act):
    # bf16 inputs, f32 accumulation on the MXU
    y = jnp.dot(x_ref[...], w_ref[...], preferred_element_type=jnp.float32)
    y = y + b_ref[...]
    if act == "tanh":
        y = jnp.tanh(y)
    elif act == "gelu":
        # exact (erf) GELU as used by the reference BERT transformer
        y = 0.5 * y * (1.0 + lax.erf(y / math.sqrt(2.0)))
    o_ref[...] = y.astype(o_ref.dtype)


def dense(x, w, b, act="none"):
    """y = act(x @ w + b); x: [M, K] f32, w: [K, N] f32, b: [N] f32 -> [M, N] f32."""
    M, K = x.shape
    N = w.shape[1]

    TM = _row_tile(M, 256)
    Mp = _round_up(M, TM)
    Np = _round_up(N, 128)                      # lane-dense (unmasked) stores
    TN = 512 if Np % 512 == 0 else (256 if Np % 256 == 0 else 128)

    xp = x if Mp == M else jnp.pad(x, ((0, Mp - M), (0, 0)))
    wp = w if Np == N else jnp.pad(w, ((0, 0), (0, Np - N)))
    bp = b if Np == N else jnp.pad(b, (0, Np - N))

    # TODO(synk): K (the contraction dim) is kept whole; add K tiling + f32
    # accumulator scratch for hidden sizes where (K x TN) no longer fits VMEM.
    out = pl.pallas_call(
        functools.partial(_dense_kernel, act=act),
        out_shape=jax.ShapeDtypeStruct((Mp, Np), jnp.float32),
        grid=(Mp // TM, Np // TN),
        in_specs=[
            pl.BlockSpec((TM, K), lambda i, j: (i, 0)),
            pl.BlockSpec((K, TN), lambda i, j: (0, j)),
            pl.BlockSpec((1, TN), lambda i, j: (0, j)),
        ],
        out_specs=pl.BlockSpec((TM, TN), lambda i, j: (i, j)),
        compiler_params=pltpu.CompilerParams(
            dimension_semantics=("parallel", "parallel")),
    )(xp.astype(jnp.bfloat16), wp.astype(jnp.bfloat16), bp.reshape(1, Np))

    if Mp != M or Np != N:
        out = out[:M, :N]
    return out


# ----------------------------- layernorm (+ fused residual) -----------------------------

def _ln_compute(x, g, b, eps):
    u = jnp.mean(x, axis=-1, keepdims=True)
    s = jnp.mean((x - u) ** 2, axis=-1, keepdims=True)
    return (x - u) * lax.rsqrt(s + eps) * g + b


def _layernorm_kernel(x_ref, g_ref, b_ref, o_ref, *, eps):
    o_ref[...] = _ln_compute(x_ref[...], g_ref[...], b_ref[...], eps).astype(o_ref.dtype)


def _add_layernorm_kernel(x_ref, r_ref, g_ref, b_ref, o_ref, *, eps):
    # residual add fused into the (memory-bound) layernorm kernel
    o_ref[...] = _ln_compute(x_ref[...] + r_ref[...], g_ref[...], b_ref[...],
                             eps).astype(o_ref.dtype)


def layernorm(x, gamma, beta, residual=None, eps=1e-12):
    """LayerNorm over last dim of [M, D]; optionally LN(x + residual)."""
    M, D = x.shape
    TM = _row_tile(M, 512)
    Mp = _round_up(M, TM)

    xs = [x] if residual is None else [x, residual]
    if Mp != M:
        xs = [jnp.pad(a, ((0, Mp - M), (0, 0))) for a in xs]

    kern = _layernorm_kernel if residual is None else _add_layernorm_kernel
    in_specs = ([pl.BlockSpec((TM, D), lambda i: (i, 0)) for _ in xs]
                + [pl.BlockSpec((1, D), lambda i: (0, 0)),
                   pl.BlockSpec((1, D), lambda i: (0, 0))])

    out = pl.pallas_call(
        functools.partial(kern, eps=eps),
        out_shape=jax.ShapeDtypeStruct((Mp, D), jnp.float32),
        grid=(Mp // TM,),
        in_specs=in_specs,
        out_specs=pl.BlockSpec((TM, D), lambda i: (i, 0)),
        compiler_params=pltpu.CompilerParams(dimension_semantics=("parallel",)),
    )(*xs, gamma.reshape(1, D), beta.reshape(1, D))

    return out[:M] if Mp != M else out


# ----------------------------- flash-style attention -----------------------------

def _flash_attn_kernel(q_ref, k_ref, v_ref, mask_ref, o_ref,
                       m_sc, l_sc, acc_sc, *, scale, n_heads):
    kv_idx = pl.program_id(2)

    @pl.when(kv_idx == 0)
    def _():
        m_sc[...] = jnp.full_like(m_sc, -1e30)
        l_sc[...] = jnp.zeros_like(l_sc)
        acc_sc[...] = jnp.zeros_like(acc_sc)

    q = q_ref[0]                # (Tq, D)  bf16
    k = k_ref[0]                # (Tk, D)  bf16
    v = v_ref[0]                # (Tk, D)  bf16
    mask_add = mask_ref[0]      # (1, Tk)  f32 additive bias (0 or -10000)

    dh = q.shape[-1] // n_heads
    for h in range(n_heads):                          # static unroll over heads
        sl = slice(h * dh, (h + 1) * dh)
        qh, kh, vh = q[:, sl], k[:, sl], v[:, sl]

        # scores: (Tq, Tk) = qh @ kh^T  (f32 accumulation)
        s = lax.dot_general(qh, kh, (((1,), (1,)), ((), ())),
                            preferred_element_type=jnp.float32) * scale
        s = s + mask_add

        m_prev = m_sc[:, h:h + 1]                                   # (Tq, 1)
        m_new = jnp.maximum(m_prev, jnp.max(s, axis=-1, keepdims=True))
        alpha = jnp.exp(m_prev - m_new)
        p = jnp.exp(s - m_new)

        l_sc[:, h:h + 1] = alpha * l_sc[:, h:h + 1] + jnp.sum(p, axis=-1, keepdims=True)
        pv = lax.dot_general(p.astype(v.dtype), vh, (((1,), (0,)), ((), ())),
                             preferred_element_type=jnp.float32)    # (Tq, dh)
        acc_sc[:, sl] = alpha * acc_sc[:, sl] + pv
        m_sc[:, h:h + 1] = m_new

    @pl.when(kv_idx == pl.num_programs(2) - 1)
    def _():
        outs = []
        for h in range(n_heads):
            sl = slice(h * dh, (h + 1) * dh)
            outs.append(acc_sc[:, sl] / l_sc[:, h:h + 1])
        o_ref[0] = jnp.concatenate(outs, axis=-1).astype(o_ref.dtype)


def attention(q, k, v, mask_add, n_heads):
    """q,k,v: [B, S, D] f32 (head-interleaved); mask_add: [B, 1, S] f32 additive bias."""
    B, S, D = q.shape
    dh = D // n_heads
    scale = 1.0 / math.sqrt(dh)

    Tq = 128 if S % 128 == 0 else S
    Tkv = 128 if S % 128 == 0 else S
    # TODO(synk): for sequence lengths not divisible by 128, pad S (and mask) instead.
    assert S % Tq == 0 and S % Tkv == 0

    return pl.pallas_call(
        functools.partial(_flash_attn_kernel, scale=scale, n_heads=n_heads),
        out_shape=jax.ShapeDtypeStruct((B, S, D), jnp.float32),
        grid=(B, S // Tq, S // Tkv),
        in_specs=[
            pl.BlockSpec((1, Tq, D), lambda b, qi, ki: (b, qi, 0)),
            pl.BlockSpec((1, Tkv, D), lambda b, qi, ki: (b, ki, 0)),
            pl.BlockSpec((1, Tkv, D), lambda b, qi, ki: (b, ki, 0)),
            pl.BlockSpec((1, 1, Tkv), lambda b, qi, ki: (b, 0, ki)),
        ],
        out_specs=pl.BlockSpec((1, Tq, D), lambda b, qi, ki: (b, qi, 0)),
        scratch_shapes=[
            pltpu.VMEM((Tq, n_heads), jnp.float32),   # running max m
            pltpu.VMEM((Tq, n_heads), jnp.float32),   # running denom l
            pltpu.VMEM((Tq, D), jnp.float32),         # running output acc
        ],
        compiler_params=pltpu.CompilerParams(
            dimension_semantics=("parallel", "parallel", "arbitrary")),
    )(q.astype(jnp.bfloat16), k.astype(jnp.bfloat16), v.astype(jnp.bfloat16), mask_add)


# ----------------------------- Parameters -----------------------------

def init_params(key, cfg, n_labels):
    D, FF = cfg["dim"], cfg["dim_ff"]

    def nrm(k, shape, s=0.02):
        return s * jax.random.normal(k, shape, jnp.float32)

    keys = iter(jax.random.split(key, 8 + 8 * cfg["n_layers"]))
    params = {
        "tok_embed": nrm(next(keys), (cfg["vocab_size"], D)),
        "pos_embed": nrm(next(keys), (cfg["max_len"], D)),
        "seg_embed": nrm(next(keys), (cfg["n_segments"], D)),
        "embed_ln_g": jnp.ones((D,), jnp.float32),
        "embed_ln_b": jnp.zeros((D,), jnp.float32),
        "layers": [],
        "fc_w": nrm(next(keys), (D, D)),
        "fc_b": jnp.zeros((D,), jnp.float32),
        "cls_w": nrm(next(keys), (D, n_labels)),
        "cls_b": jnp.zeros((n_labels,), jnp.float32),
    }
    for _ in range(cfg["n_layers"]):
        params["layers"].append({
            "wq": nrm(next(keys), (D, D)), "bq": jnp.zeros((D,), jnp.float32),
            "wk": nrm(next(keys), (D, D)), "bk": jnp.zeros((D,), jnp.float32),
            "wv": nrm(next(keys), (D, D)), "bv": jnp.zeros((D,), jnp.float32),
            "wo": nrm(next(keys), (D, D)), "bo": jnp.zeros((D,), jnp.float32),
            "ln1_g": jnp.ones((D,), jnp.float32), "ln1_b": jnp.zeros((D,), jnp.float32),
            "w1": nrm(next(keys), (D, FF)), "b1": jnp.zeros((FF,), jnp.float32),
            "w2": nrm(next(keys), (FF, D)), "b2": jnp.zeros((D,), jnp.float32),
            "ln2_g": jnp.ones((D,), jnp.float32), "ln2_b": jnp.zeros((D,), jnp.float32),
        })
    return params


# ----------------------------- Forward pass -----------------------------

def classifier_forward(params, cfg, input_ids, segment_ids, input_mask):
    B, S = input_ids.shape
    D, H = cfg["dim"], cfg["n_heads"]

    # --- Embeddings (gathers in plain JAX, LayerNorm in Pallas) ---
    pos = jnp.arange(S)
    e = (params["tok_embed"][input_ids]
         + params["pos_embed"][pos][None, :, :]
         + params["seg_embed"][segment_ids])
    h = layernorm(e.reshape(B * S, D), params["embed_ln_g"], params["embed_ln_b"])
    # TODO(synk): nn.Dropout layers run in inference mode here (identity).

    # Precomputed additive mask: 0 for real tokens, -10000 for padding keys.
    mask_add = ((input_mask.astype(jnp.float32) - 1.0) * 10000.0).reshape(B, 1, S)

    # --- Transformer blocks ---
    for lp in params["layers"]:
        # fused QKV projection: one (D, 3D) matmul instead of three (D, D)
        wqkv = jnp.concatenate([lp["wq"], lp["wk"], lp["wv"]], axis=1)
        bqkv = jnp.concatenate([lp["bq"], lp["bk"], lp["bv"]])
        qkv = dense(h, wqkv, bqkv).reshape(B, S, 3 * D)
        q, k, v = qkv[..., :D], qkv[..., D:2 * D], qkv[..., 2 * D:]

        a = attention(q, k, v, mask_add, n_heads=H)            # (B, S, D), no transposes
        attn_out = dense(a.reshape(B * S, D), lp["wo"], lp["bo"])
        h = layernorm(attn_out, lp["ln1_g"], lp["ln1_b"], residual=h)

        ff = dense(dense(h, lp["w1"], lp["b1"], act="gelu"), lp["w2"], lp["b2"])
        h = layernorm(ff, lp["ln2_g"], lp["ln2_b"], residual=h)

    h = h.reshape(B, S, D)

    # --- Pooler + classifier head (fc -> tanh -> [dropout=id] -> linear) ---
    pooled = dense(h[:, 0], params["fc_w"], params["fc_b"], act="tanh")
    logits = dense(pooled, params["cls_w"], params["cls_b"])   # N padded to 128 inside
    return logits


# ----------------------------- Main -----------------------------

if __name__ == "__main__":
    cfg = dict(vocab_size=40, dim=32, n_layers=2, n_heads=4, dim_ff=64,
               max_len=16, n_segments=2, p_drop_hidden=0.0)
    n_labels = 3
    B, S = 2, 8

    key = jax.random.PRNGKey(0)
    kp, k1, k2 = jax.random.split(key, 3)
    params = init_params(kp, cfg, n_labels)

    input_ids = jax.random.randint(k1, (B, S), 0, cfg["vocab_size"], dtype=jnp.int32)
    segment_ids = jax.random.randint(k2, (B, S), 0, cfg["n_segments"], dtype=jnp.int32)
    input_mask = jnp.array([[1, 1, 1, 1, 1, 1, 1, 1],
                            [1, 1, 1, 1, 1, 1, 0, 0]], dtype=jnp.int32)

    fwd = jax.jit(lambda p, ii, si, im: classifier_forward(p, cfg, ii, si, im))
    logits = fwd(params, input_ids, segment_ids, input_mask)
    logits = jax.block_until_ready(logits)
    assert logits.shape == (B, n_labels) and logits.dtype == jnp.float32
    print("KERNEL_OK")
</pallas_src>

<mosaic_0001>
module attributes {stable_mosaic.version = 11 : i64} {
  func.func @_layernorm_kernel(%arg0: i32, %arg1: memref<16x32xf32, #tpu.memory_space<vmem>>, %arg2: memref<1x32xf32, #tpu.memory_space<vmem>>, %arg3: memref<1x32xf32, #tpu.memory_space<vmem>>, %arg4: memref<16x32xf32, #tpu.memory_space<vmem>>) attributes {dimension_semantics = [#tpu.dimension_semantics<parallel>], iteration_bounds = array<i64: 1>, scalar_prefetch = 0 : i64, scratch_operands = 0 : i64, tpu.core_type = #tpu.core_type<tc>, window_params = [{transform_indices = @transform_0, window_bounds = array<i64: 16, 32>}, {pipeline_mode = #tpu.pipeline_mode<synchronous>, transform_indices = @transform_1, window_bounds = array<i64: 1, 32>}, {pipeline_mode = #tpu.pipeline_mode<synchronous>, transform_indices = @transform_2, window_bounds = array<i64: 1, 32>}, {transform_indices = @transform_3, window_bounds = array<i64: 16, 32>}]} {
    %c0 = arith.constant 0 : index
    %c0_0 = arith.constant 0 : index
    %0 = vector.load %arg1[%c0, %c0_0] : memref<16x32xf32, #tpu.memory_space<vmem>>, vector<16x32xf32>
    %c0_1 = arith.constant 0 : index
    %c0_2 = arith.constant 0 : index
    %1 = vector.load %arg2[%c0_1, %c0_2] : memref<1x32xf32, #tpu.memory_space<vmem>>, vector<1x32xf32>
    %c0_3 = arith.constant 0 : index
    %c0_4 = arith.constant 0 : index
    %2 = vector.load %arg3[%c0_3, %c0_4] : memref<1x32xf32, #tpu.memory_space<vmem>>, vector<1x32xf32>
    %cst = arith.constant dense<0.000000e+00> : vector<16xf32>
    %3 = vector.multi_reduction <add>, %0, %cst [1] : vector<16x32xf32> to vector<16xf32>
    %4 = vector.shape_cast %3 : vector<16xf32> to vector<16x1xf32>
    %cst_5 = arith.constant 3.200000e+01 : f32
    %5 = vector.broadcast %cst_5 : f32 to vector<16x1xf32>
    %6 = arith.divf %4, %5 : vector<16x1xf32>
    %7 = vector.broadcast %6 : vector<16x1xf32> to vector<16x32xf32>
    %8 = arith.subf %0, %7 : vector<16x32xf32>
    %9 = arith.mulf %8, %8 : vector<16x32xf32>
    %cst_6 = arith.constant dense<0.000000e+00> : vector<16xf32>
    %10 = vector.multi_reduction <add>, %9, %cst_6 [1] : vector<16x32xf32> to vector<16xf32>
    %11 = vector.shape_cast %10 : vector<16xf32> to vector<16x1xf32>
    %cst_7 = arith.constant 3.200000e+01 : f32
    %12 = vector.broadcast %cst_7 : f32 to vector<16x1xf32>
    %13 = arith.divf %11, %12 : vector<16x1xf32>
    %14 = vector.broadcast %6 : vector<16x1xf32> to vector<16x32xf32>
    %15 = arith.subf %0, %14 : vector<16x32xf32>
    %cst_8 = arith.constant 9.99999996E-13 : f32
    %16 = vector.broadcast %cst_8 : f32 to vector<16x1xf32>
    %17 = arith.addf %13, %16 : vector<16x1xf32>
    %18 = math.rsqrt %17 : vector<16x1xf32>
    %19 = vector.broadcast %18 : vector<16x1xf32> to vector<16x32xf32>
    %20 = arith.mulf %15, %19 : vector<16x32xf32>
    %21 = vector.broadcast %1 : vector<1x32xf32> to vector<16x32xf32>
    %22 = arith.mulf %20, %21 : vector<16x32xf32>
    %23 = vector.broadcast %2 : vector<1x32xf32> to vector<16x32xf32>
    %24 = arith.addf %22, %23 : vector<16x32xf32>
    %c0_9 = arith.constant 0 : index
    %c0_10 = arith.constant 0 : index
    %25 = vector.load %arg4[%c0_9, %c0_10] : memref<16x32xf32, #tpu.memory_space<vmem>>, vector<16x32xf32>
    tpu.vector_store %arg4[%c0_9, %c0_10], %24 {strides = array<i32>} : memref<16x32xf32, #tpu.memory_space<vmem>>, vector<16x32xf32>,
    return
  }
  func.func @transform_0(%arg0: i32) -> (i32, i32) {
    %c0_i32 = arith.constant 0 : i32
    %c0_i32_0 = arith.constant 0 : i32
    return %arg0, %c0_i32 : i32, i32
  }
  func.func @transform_1(%arg0: i32) -> (i32, i32) {
    %c0_i32 = arith.constant 0 : i32
    %c0_i32_0 = arith.constant 0 : i32
    %c0_i32_1 = arith.constant 0 : i32
    return %c0_i32, %c0_i32_0 : i32, i32
  }
  func.func @transform_2(%arg0: i32) -> (i32, i32) {
    %c0_i32 = arith.constant 0 : i32
    %c0_i32_0 = arith.constant 0 : i32
    %c0_i32_1 = arith.constant 0 : i32
    return %c0_i32, %c0_i32_0 : i32, i32
  }
  func.func @transform_3(%arg0: i32) -> (i32, i32) {
    %c0_i32 = arith.constant 0 : i32
    %c0_i32_0 = arith.constant 0 : i32
    return %arg0, %c0_i32 : i32, i32
  }
}

module attributes {stable_mosaic.version = 11 : i64} {
  func.func @_dense_kernel(%arg0: i32, %arg1: i32, %arg2: memref<16x32xbf16, #tpu.memory_space<vmem>>, %arg3: memref<32x128xbf16, #tpu.memory_space<vmem>>, %arg4: memref<1x128xf32, #tpu.memory_space<vmem>>, %arg5: memref<16x128xf32, #tpu.memory_space<vmem>>) attributes {dimension_semantics = [#tpu.dimension_semantics<parallel>, #tpu.dimension_semantics<parallel>], iteration_bounds = array<i64: 1, 1>, scalar_prefetch = 0 : i64, scratch_operands = 0 : i64, tpu.core_type = #tpu.core_type<tc>, window_params = [{transform_indices = @transform_0, window_bounds = array<i64: 16, 32>}, {transform_indices = @transform_1, window_bounds = array<i64: 32, 128>}, {transform_indices = @transform_2, window_bounds = array<i64: 1, 128>}, {transform_indices = @transform_3, window_bounds = array<i64: 16, 128>}]} {
    %c0 = arith.constant 0 : index
    %c0_0 = arith.constant 0 : index
    %0 = vector.load %arg2[%c0, %c0_0] : memref<16x32xbf16, #tpu.memory_space<vmem>>, vector<16x32xbf16>
    %c0_1 = arith.constant 0 : index
    %c0_2 = arith.constant 0 : index
    %1 = vector.load %arg3[%c0_1, %c0_2] : memref<32x128xbf16, #tpu.memory_space<vmem>>, vector<32x128xbf16>
    %cst = arith.constant dense<0.000000e+00> : vector<16x128xf32>
    %2 = tpu.matmul %0, %1, %cst {dimension_numbers = #tpu.dot_dimension_numbers<[1], [0], [0], [1], [0, 0, 1, 1], [], []>} : vector<16x32xbf16>, vector<32x128xbf16>, vector<16x128xf32> -> vector<16x128xf32>
    %c0_3 = arith.constant 0 : index
    %c0_4 = arith.constant 0 : index
    %3 = vector.load %arg4[%c0_3, %c0_4] : memref<1x128xf32, #tpu.memory_space<vmem>>, vector<1x128xf32>
    %4 = vector.broadcast %3 : vector<1x128xf32> to vector<16x128xf32>
    %5 = arith.addf %2, %4 : vector<16x128xf32>
    %c0_5 = arith.constant 0 : index
    %c0_6 = arith.constant 0 : index
    %6 = vector.load %arg5[%c0_5, %c0_6] : memref<16x128xf32, #tpu.memory_space<vmem>>, vector<16x128xf32>
    tpu.vector_store %arg5[%c0_5, %c0_6], %5 {strides = array<i32>} : memref<16x128xf32, #tpu.memory_space<vmem>>, vector<16x128xf32>,
    return
  }
  func.func @transform_0(%arg0: i32, %arg1: i32) -> (i32, i32) {
    %c0_i32 = arith.constant 0 : i32
    %c0_i32_0 = arith.constant 0 : i32
    return %arg0, %c0_i32 : i32, i32
  }
  func.func @transform_1(%arg0: i32, %arg1: i32) -> (i32, i32) {
    %c0_i32 = arith.constant 0 : i32
    %c0_i32_0 = arith.constant 0 : i32
    return %c0_i32, %arg1 : i32, i32
  }
  func.func @transform_2(%arg0: i32, %arg1: i32) -> (i32, i32) {
    %c0_i32 = arith.constant 0 : i32
    %c0_i32_0 = arith.constant 0 : i32
    return %c0_i32, %arg1 : i32, i32
  }
  func.func @transform_3(%arg0: i32, %arg1: i32) -> (i32, i32) {
    %c0_i32 = arith.constant 0 : i32
    return %arg0, %arg1 : i32, i32
  }
}

module attributes {stable_mosaic.version = 11 : i64} {
  func.func @_flash_attn_kernel(%arg0: i32, %arg1: i32, %arg2: i32, %arg3: memref<1x8x32xbf16, #tpu.memory_space<vmem>>, %arg4: memref<1x8x32xbf16, #tpu.memory_space<vmem>>, %arg5: memref<1x8x32xbf16, #tpu.memory_space<vmem>>, %arg6: memref<1x1x8xf32, #tpu.memory_space<vmem>>, %arg7: memref<1x8x32xf32, #tpu.memory_space<vmem>>, %arg8: memref<8x4xf32, #tpu.memory_space<vmem>>, %arg9: memref<8x4xf32, #tpu.memory_space<vmem>>, %arg10: memref<8x32xf32, #tpu.memory_space<vmem>>) attributes {dimension_semantics = [#tpu.dimension_semantics<parallel>, #tpu.dimension_semantics<parallel>, #tpu.dimension_semantics<arbitrary>], iteration_bounds = array<i64: 2, 1, 1>, scalar_prefetch = 0 : i64, scratch_operands = 3 : i64, tpu.core_type = #tpu.core_type<tc>, window_params = [{transform_indices = @transform_0, window_bounds = array<i64: 1, 8, 32>}, {transform_indices = @transform_1, window_bounds = array<i64: 1, 8, 32>}, {transform_indices = @transform_2, window_bounds = array<i64: 1, 8, 32>}, {transform_indices = @transform_3, window_bounds = array<i64: 1, 1, 8>}, {transform_indices = @transform_4, window_bounds = array<i64: 1, 8, 32>}]} {
    %c0_i32 = arith.constant 0 : i32
    %0 = arith.cmpi eq, %arg2, %c0_i32 : i32
    %1 = arith.extui %0 : i1 to i32
    %c0_i32_0 = arith.constant 0 : i32
    %2 = arith.cmpi ne, %1, %c0_i32_0 : i32
    scf.if %2 {
      %cst_75 = arith.constant -1.000000e+30 : f32
      %138 = vector.broadcast %cst_75 : f32 to vector<8x4xf32>
      %c0_76 = arith.constant 0 : index
      %c0_77 = arith.constant 0 : index
      %139 = vector.load %arg8[%c0_76, %c0_77] : memref<8x4xf32, #tpu.memory_space<vmem>>, vector<8x4xf32>
      tpu.vector_store %arg8[%c0_76, %c0_77], %138 {strides = array<i32>} : memref<8x4xf32, #tpu.memory_space<vmem>>, vector<8x4xf32>,
      %cst_78 = arith.constant 0.000000e+00 : f32
      %140 = vector.broadcast %cst_78 : f32 to vector<8x4xf32>
      %c0_79 = arith.constant 0 : index
      %c0_80 = arith.constant 0 : index
      %141 = vector.load %arg9[%c0_79, %c0_80] : memref<8x4xf32, #tpu.memory_space<vmem>>, vector<8x4xf32>
      tpu.vector_store %arg9[%c0_79, %c0_80], %140 {strides = array<i32>} : memref<8x4xf32, #tpu.memory_space<vmem>>, vector<8x4xf32>,
      %cst_81 = arith.constant 0.000000e+00 : f32
      %142 = vector.broadcast %cst_81 : f32 to vector<8x32xf32>
      %c0_82 = arith.constant 0 : index
      %c0_83 = arith.constant 0 : index
      %143 = vector.load %arg10[%c0_82, %c0_83] : memref<8x32xf32, #tpu.memory_space<vmem>>, vector<8x32xf32>
      tpu.vector_store %arg10[%c0_82, %c0_83], %142 {strides = array<i32>} : memref<8x32xf32, #tpu.memory_space<vmem>>, vector<8x32xf32>,
    } else {
    }
    %c0 = arith.constant 0 : index
    %c0_1 = arith.constant 0 : index
    %c0_2 = arith.constant 0 : index
    %3 = vector.load %arg3[%c0, %c0_1, %c0_2] : memref<1x8x32xbf16, #tpu.memory_space<vmem>>, vector<1x8x32xbf16>
    %4 = vector.shape_cast %3 : vector<1x8x32xbf16> to vector<8x32xbf16>
    %c0_3 = arith.constant 0 : index
    %c0_4 = arith.constant 0 : index
    %c0_5 = arith.constant 0 : index
    %5 = vector.load %arg4[%c0_3, %c0_4, %c0_5] : memref<1x8x32xbf16, #tpu.memory_space<vmem>>, vector<1x8x32xbf16>
    %6 = vector.shape_cast %5 : vector<1x8x32xbf16> to vector<8x32xbf16>
    %c0_6 = arith.constant 0 : index
    %c0_7 = arith.constant 0 : index
    %c0_8 = arith.constant 0 : index
    %7 = vector.load %arg5[%c0_6, %c0_7, %c0_8] : memref<1x8x32xbf16, #tpu.memory_space<vmem>>, vector<1x8x32xbf16>
    %8 = vector.shape_cast %7 : vector<1x8x32xbf16> to vector<8x32xbf16>
    %c0_9 = arith.constant 0 : index
    %c0_10 = arith.constant 0 : index
    %c0_11 = arith.constant 0 : index
    %9 = vector.load %arg6[%c0_9, %c0_10, %c0_11] : memref<1x1x8xf32, #tpu.memory_space<vmem>>, vector<1x1x8xf32>
    %10 = vector.shape_cast %9 : vector<1x1x8xf32> to vector<1x8xf32>
    %11 = vector.extract_strided_slice %4 {offsets = [0, 0], sizes = [8, 8], strides = [1, 1]} : vector<8x32xbf16> to vector<8x8xbf16>
    %12 = vector.extract_strided_slice %6 {offsets = [0, 0], sizes = [8, 8], strides = [1, 1]} : vector<8x32xbf16> to vector<8x8xbf16>
    %13 = vector.extract_strided_slice %8 {offsets = [0, 0], sizes = [8, 8], strides = [1, 1]} : vector<8x32xbf16> to vector<8x8xbf16>
    %cst = arith.constant dense<0.000000e+00> : vector<8x8xf32>
    %14 = tpu.matmul %11, %12, %cst {dimension_numbers = #tpu.dot_dimension_numbers<[1], [1], [0], [0], [0, 0, 1, 0], [], []>} : vector<8x8xbf16>, vector<8x8xbf16>, vector<8x8xf32> -> vector<8x8xf32>
    %cst_12 = arith.constant 0.353553385 : f32
    %15 = vector.broadcast %cst_12 : f32 to vector<8x8xf32>
    %16 = arith.mulf %14, %15 : vector<8x8xf32>
    %17 = vector.broadcast %10 : vector<1x8xf32> to vector<8x8xf32>
    %18 = arith.addf %16, %17 : vector<8x8xf32>
    %c0_13 = arith.constant 0 : index
    %c0_14 = arith.constant 0 : index
    %19 = vector.load %arg8[%c0_13, %c0_14] : memref<8x4xf32, #tpu.memory_space<vmem>>, vector<8x1xf32>
    %cst_15 = arith.constant dense<0xFF800000> : vector<8xf32>
    %20 = vector.multi_reduction <maximumf>, %18, %cst_15 [1] : vector<8x8xf32> to vector<8xf32>
    %21 = vector.shape_cast %20 : vector<8xf32> to vector<8x1xf32>
    %22 = arith.maximumf %19, %21 : vector<8x1xf32>
    %23 = arith.subf %19, %22 : vector<8x1xf32>
    %24 = math.exp %23 : vector<8x1xf32>
    %25 = vector.broadcast %22 : vector<8x1xf32> to vector<8x8xf32>
    %26 = arith.subf %18, %25 : vector<8x8xf32>
    %27 = math.exp %26 : vector<8x8xf32>
    %c0_16 = arith.constant 0 : index
    %c0_17 = arith.constant 0 : index
    %28 = vector.load %arg9[%c0_16, %c0_17] : memref<8x4xf32, #tpu.memory_space<vmem>>, vector<8x1xf32>
    %29 = arith.mulf %24, %28 : vector<8x1xf32>
    %cst_18 = arith.constant dense<0.000000e+00> : vector<8xf32>
    %30 = vector.multi_reduction <add>, %27, %cst_18 [1] : vector<8x8xf32> to vector<8xf32>
    %31 = vector.shape_cast %30 : vector<8xf32> to vector<8x1xf32>
    %32 = arith.addf %29, %31 : vector<8x1xf32>
    %c0_19 = arith.constant 0 : index
    %c0_20 = arith.constant 0 : index
    %33 = vector.load %arg9[%c0_19, %c0_20] : memref<8x4xf32, #tpu.memory_space<vmem>>, vector<8x1xf32>
    tpu.vector_store %arg9[%c0_19, %c0_20], %32 {strides = array<i32>} : memref<8x4xf32, #tpu.memory_space<vmem>>, vector<8x1xf32>,
    %34 = arith.truncf %27 : vector<8x8xf32> to vector<8x8xbf16>
    %cst_21 = arith.constant dense<0.000000e+00> : vector<8x8xf32>
    %35 = tpu.matmul %34, %13, %cst_21 {dimension_numbers = #tpu.dot_dimension_numbers<[1], [0], [0], [1], [0, 0, 1, 1], [], []>} : vector<8x8xbf16>, vector<8x8xbf16>, vector<8x8xf32> -> vector<8x8xf32>
    %c0_22 = arith.constant 0 : index
    %c0_23 = arith.constant 0 : index
    %36 = vector.load %arg10[%c0_22, %c0_23] : memref<8x32xf32, #tpu.memory_space<vmem>>, vector<8x8xf32>
    %37 = vector.broadcast %24 : vector<8x1xf32> to vector<8x8xf32>
    %38 = arith.mulf %37, %36 : vector<8x8xf32>
    %39 = arith.addf %38, %35 : vector<8x8xf32>
    %c0_24 = arith.constant 0 : index
    %c0_25 = arith.constant 0 : index
    %40 = vector.load %arg10[%c0_24, %c0_25] : memref<8x32xf32, #tpu.memory_space<vmem>>, vector<8x8xf32>
    tpu.vector_store %arg10[%c0_24, %c0_25], %39 {strides = array<i32>} : memref<8x32xf32, #tpu.memory_space<vmem>>, vector<8x8xf32>,
    %c0_26 = arith.constant 0 : index
    %c0_27 = arith.constant 0 : index
    %41 = vector.load %arg8[%c0_26, %c0_27] : memref<8x4xf32, #tpu.memory_space<vmem>>, vector<8x1xf32>
    tpu.vector_store %arg8[%c0_26, %c0_27], %22 {strides = array<i32>} : memref<8x4xf32, #tpu.memory_space<vmem>>, vector<8x1xf32>,
    %42 = vector.extract_strided_slice %4 {offsets = [0, 8], sizes = [8, 8], strides = [1, 1]} : vector<8x32xbf16> to vector<8x8xbf16>
    %43 = vector.extract_strided_slice %6 {offsets = [0, 8], sizes = [8, 8], strides = [1, 1]} : vector<8x32xbf16> to vector<8x8xbf16>
    %44 = vector.extract_strided_slice %8 {offsets = [0, 8], sizes = [8, 8], strides = [1, 1]} : vector<8x32xbf16> to vector<8x8xbf16>
    %cst_28 = arith.constant dense<0.000000e+00> : vector<8x8xf32>
    %45 = tpu.matmul %42, %43, %cst_28 {dimension_numbers = #tpu.dot_dimension_numbers<[1], [1], [0], [0], [0, 0, 1, 0], [], []>} : vector<8x8xbf16>, vector<8x8xbf16>, vector<8x8xf32> -> vector<8x8xf32>
    %cst_29 = arith.constant 0.353553385 : f32
    %46 = vector.broadcast %cst_29 : f32 to vector<8x8xf32>
    %47 = arith.mulf %45, %46 : vector<8x8xf32>
    %48 = vector.broadcast %10 : vector<1x8xf32> to vector<8x8xf32>
    %49 = arith.addf %47, %48 : vector<8x8xf32>
    %c0_30 = arith.constant 0 : index
    %c1 = arith.constant 1 : index
    %50 = vector.load %arg8[%c0_30, %c1] : memref<8x4xf32, #tpu.memory_space<vmem>>, vector<8x1xf32>
    %cst_31 = arith.constant dense<0xFF800000> : vector<8xf32>
    %51 = vector.multi_reduction <maximumf>, %49, %cst_31 [1] : vector<8x8xf32> to vector<8xf32>
    %52 = vector.shape_cast %51 : vector<8xf32> to vector<8x1xf32>
    %53 = arith.maximumf %50, %52 : vector<8x1xf32>
    %54 = arith.subf %50, %53 : vector<8x1xf32>
    %55 = math.exp %54 : vector<8x1xf32>
    %56 = vector.broadcast %53 : vector<8x1xf32> to vector<8x8xf32>
    %57 = arith.subf %49, %56 : vector<8x8xf32>
    %58 = math.exp %57 : vector<8x8xf32>
    %c0_32 = arith.constant 0 : index
    %c1_33 = arith.constant 1 : index
    %59 = vector.load %arg9[%c0_32, %c1_33] : memref<8x4xf32, #tpu.memory_space<vmem>>, vector<8x1xf32>
    %60 = arith.mulf %55, %59 : vector<8x1xf32>
    %cst_34 = arith.constant dense<0.000000e+00> : vector<8xf32>
    %61 = vector.multi_reduction <add>, %58, %cst_34 [1] : vector<8x8xf32> to vector<8xf32>
    %62 = vector.shape_cast %61 : vector<8xf32> to vector<8x1xf32>
    %63 = arith.addf %60, %62 : vector<8x1xf32>
    %c0_35 = arith.constant 0 : index
    %c1_36 = arith.constant 1 : index
    %64 = vector.load %arg9[%c0_35, %c1_36] : memref<8x4xf32, #tpu.memory_space<vmem>>, vector<8x1xf32>
    tpu.vector_store %arg9[%c0_35, %c1_36], %63 {strides = array<i32>} : memref<8x4xf32, #tpu.memory_space<vmem>>, vector<8x1xf32>,
    %65 = arith.truncf %58 : vector<8x8xf32> to vector<8x8xbf16>
    %cst_37 = arith.constant dense<0.000000e+00> : vector<8x8xf32>
    %66 = tpu.matmul %65, %44, %cst_37 {dimension_numbers = #tpu.dot_dimension_numbers<[1], [0], [0], [1], [0, 0, 1, 1], [], []>} : vector<8x8xbf16>, vector<8x8xbf16>, vector<8x8xf32> -> vector<8x8xf32>
    %c0_38 = arith.constant 0 : index
    %c8 = arith.constant 8 : index
    %67 = vector.load %arg10[%c0_38, %c8] : memref<8x32xf32, #tpu.memory_space<vmem>>, vector<8x8xf32>
    %68 = vector.broadcast %55 : vector<8x1xf32> to vector<8x8xf32>
    %69 = arith.mulf %68, %67 : vector<8x8xf32>
    %70 = arith.addf %69, %66 : vector<8x8xf32>
    %c0_39 = arith.constant 0 : index
    %c8_40 = arith.constant 8 : index
    %71 = vector.load %arg10[%c0_39, %c8_40] : memref<8x32xf32, #tpu.memory_space<vmem>>, vector<8x8xf32>
    tpu.vector_store %arg10[%c0_39, %c8_40], %70 {strides = array<i32>} : memref<8x32xf32, #tpu.memory_space<vmem>>, vector<8x8xf32>,
    %c0_41 = arith.constant 0 : index
    %c1_42 = arith.constant 1 : index
    %72 = vector.load %arg8[%c0_41, %c1_42] : memref<8x4xf32, #tpu.memory_space<vmem>>, vector<8x1xf32>
    tpu.vector_store %arg8[%c0_41, %c1_42], %53 {strides = array<i32>} : memref<8x4xf32, #tpu.memory_space<vmem>>, vector<8x1xf32>,
    %73 = vector.extract_strided_slice %4 {offsets = [0, 16], sizes = [8, 8], strides = [1, 1]} : vector<8x32xbf16> to vector<8x8xbf16>
    %74 = vector.extract_strided_slice %6 {offsets = [0, 16], sizes = [8, 8], strides = [1, 1]} : vector<8x32xbf16> to vector<8x8xbf16>
    %75 = vector.extract_strided_slice %8 {offsets = [0, 16], sizes = [8, 8], strides = [1, 1]} : vector<8x32xbf16> to vector<8x8xbf16>
    %cst_43 = arith.constant dense<0.000000e+00> : vector<8x8xf32>
    %76 = tpu.matmul %73, %74, %cst_43 {dimension_numbers = #tpu.dot_dimension_numbers<[1], [1], [0], [0], [0, 0, 1, 0], [], []>} : vector<8x8xbf16>, vector<8x8xbf16>, vector<8x8xf32> -> vector<8x8xf32>
    %cst_44 = arith.constant 0.353553385 : f32
    %77 = vector.broadcast %cst_44 : f32 to vector<8x8xf32>
    %78 = arith.mulf %76, %77 : vector<8x8xf32>
    %79 = vector.broadcast %10 : vector<1x8xf32> to vector<8x8xf32>
    %80 = arith.addf %78, %79 : vector<8x8xf32>
    %c0_45 = arith.constant 0 : index
    %c2 = arith.constant 2 : index
    %81 = vector.load %arg8[%c0_45, %c2] : memref<8x4xf32, #tpu.memory_space<vmem>>, vector<8x1xf32>
    %cst_46 = arith.constant dense<0xFF800000> : vector<8xf32>
    %82 = vector.multi_reduction <maximumf>, %80, %cst_46 [1] : vector<8x8xf32> to vector<8xf32>
    %83 = vector.shape_cast %82 : vector<8xf32> to vector<8x1xf32>
    %84 = arith.maximumf %81, %83 : vector<8x1xf32>
    %85 = arith.subf %81, %84 : vector<8x1xf32>
    %86 = math.exp %85 : vector<8x1xf32>
    %87 = vector.broadcast %84 : vector<8x1xf32> to vector<8x8xf32>
    %88 = arith.subf %80, %87 : vector<8x8xf32>
    %89 = math.exp %88 : vector<8x8xf32>
    %c0_47 = arith.constant 0 : index
    %c2_48 = arith.constant 2 : index
    %90 = vector.load %arg9[%c0_47, %c2_48] : memref<8x4xf32, #tpu.memory_space<vmem>>, vector<8x1xf32>
    %91 = arith.mulf %86, %90 : vector<8x1xf32>
    %cst_49 = arith.constant dense<0.000000e+00> : vector<8xf32>
    %92 = vector.multi_reduction <add>, %89, %cst_49 [1] : vector<8x8xf32> to vector<8xf32>
    %93 = vector.shape_cast %92 : vector<8xf32> to vector<8x1xf32>
    %94 = arith.addf %91, %93 : vector<8x1xf32>
    %c0_50 = arith.constant 0 : index
    %c2_51 = arith.constant 2 : index
    %95 = vector.load %arg9[%c0_50, %c2_51] : memref<8x4xf32, #tpu.memory_space<vmem>>, vector<8x1xf32>
    tpu.vector_store %arg9[%c0_50, %c2_51], %94 {strides = array<i32>} : memref<8x4xf32, #tpu.memory_space<vmem>>, vector<8x1xf32>,
    %96 = arith.truncf %89 : vector<8x8xf32> to vector<8x8xbf16>
    %cst_52 = arith.constant dense<0.000000e+00> : vector<8x8xf32>
    %97 = tpu.matmul %96, %75, %cst_52 {dimension_numbers = #tpu.dot_dimension_numbers<[1], [0], [0], [1], [0, 0, 1, 1], [], []>} : vector<8x8xbf16>, vector<8x8xbf16>, vector<8x8xf32> -> vector<8x8xf32>
    %c0_53 = arith.constant 0 : index
    %c16 = arith.constant 16 : index
    %98 = vector.load %arg10[%c0_53, %c16] : memref<8x32xf32, #tpu.memory_space<vmem>>, vector<8x8xf32>
    %99 = vector.broadcast %86 : vector<8x1xf32> to vector<8x8xf32>
    %100 = arith.mulf %99, %98 : vector<8x8xf32>
    %101 = arith.addf %100, %97 : vector<8x8xf32>
    %c0_54 = arith.constant 0 : index
    %c16_55 = arith.constant 16 : index
    %102 = vector.load %arg10[%c0_54, %c16_55] : memref<8x32xf32, #tpu.memory_space<vmem>>, vector<8x8xf32>
    tpu.vector_store %arg10[%c0_54, %c16_55], %101 {strides = array<i32>} : memref<8x32xf32, #tpu.memory_space<vmem>>, vector<8x8xf32>,
    %c0_56 = arith.constant 0 : index
    %c2_57 = arith.constant 2 : index
    %103 = vector.load %arg8[%c0_56, %c2_57] : memref<8x4xf32, #tpu.memory_space<vmem>>, vector<8x1xf32>
    tpu.vector_store %arg8[%c0_56, %c2_57], %84 {strides = array<i32>} : memref<8x4xf32, #tpu.memory_space<vmem>>, vector<8x1xf32>,
    %104 = vector.extract_strided_slice %4 {offsets = [0, 24], sizes = [8, 8], strides = [1, 1]} : vector<8x32xbf16> to vector<8x8xbf16>
    %105 = vector.extract_strided_slice %6 {offsets = [0, 24], sizes = [8, 8], strides = [1, 1]} : vector<8x32xbf16> to vector<8x8xbf16>
    %106 = vector.extract_strided_slice %8 {offsets = [0, 24], sizes = [8, 8], strides = [1, 1]} : vector<8x32xbf16> to vector<8x8xbf16>
    %cst_58 = arith.constant dense<0.000000e+00> : vector<8x8xf32>
    %107 = tpu.matmul %104, %105, %cst_58 {dimension_numbers = #tpu.dot_dimension_numbers<[1], [1], [0], [0], [0, 0, 1, 0], [], []>} : vector<8x8xbf16>, vector<8x8xbf16>, vector<8x8xf32> -> vector<8x8xf32>
    %cst_59 = arith.constant 0.353553385 : f32
    %108 = vector.broadcast %cst_59 : f32 to vector<8x8xf32>
    %109 = arith.mulf %107, %108 : vector<8x8xf32>
    %110 = vector.broadcast %10 : vector<1x8xf32> to vector<8x8xf32>
    %111 = arith.addf %109, %110 : vector<8x8xf32>
    %c0_60 = arith.constant 0 : index
    %c3 = arith.constant 3 : index
    %112 = vector.load %arg8[%c0_60, %c3] : memref<8x4xf32, #tpu.memory_space<vmem>>, vector<8x1xf32>
    %cst_61 = arith.constant dense<0xFF800000> : vector<8xf32>
    %113 = vector.multi_reduction <maximumf>, %111, %cst_61 [1] : vector<8x8xf32> to vector<8xf32>
    %114 = vector.shape_cast %113 : vector<8xf32> to vector<8x1xf32>
    %115 = arith.maximumf %112, %114 : vector<8x1xf32>
    %116 = arith.subf %112, %115 : vector<8x1xf32>
    %117 = math.exp %116 : vector<8x1xf32>
    %118 = vector.broadcast %115 : vector<8x1xf32> to vector<8x8xf32>
    %119 = arith.subf %111, %118 : vector<8x8xf32>
    %120 = math.exp %119 : vector<8x8xf32>
    %c0_62 = arith.constant 0 : index
    %c3_63 = arith.constant 3 : index
    %121 = vector.load %arg9[%c0_62, %c3_63] : memref<8x4xf32, #tpu.memory_space<vmem>>, vector<8x1xf32>
    %122 = arith.mulf %117, %121 : vector<8x1xf32>
    %cst_64 = arith.constant dense<0.000000e+00> : vector<8xf32>
    %123 = vector.multi_reduction <add>, %120, %cst_64 [1] : vector<8x8xf32> to vector<8xf32>
    %124 = vector.shape_cast %123 : vector<8xf32> to vector<8x1xf32>
    %125 = arith.addf %122, %124 : vector<8x1xf32>
    %c0_65 = arith.constant 0 : index
    %c3_66 = arith.constant 3 : index
    %126 = vector.load %arg9[%c0_65, %c3_66] : memref<8x4xf32, #tpu.memory_space<vmem>>, vector<8x1xf32>
    tpu.vector_store %arg9[%c0_65, %c3_66], %125 {strides = array<i32>} : memref<8x4xf32, #tpu.memory_space<vmem>>, vector<8x1xf32>,
    %127 = arith.truncf %120 : vector<8x8xf32> to vector<8x8xbf16>
    %cst_67 = arith.constant dense<0.000000e+00> : vector<8x8xf32>
    %128 = tpu.matmul %127, %106, %cst_67 {dimension_numbers = #tpu.dot_dimension_numbers<[1], [0], [0], [1], [0, 0, 1, 1], [], []>} : vector<8x8xbf16>, vector<8x8xbf16>, vector<8x8xf32> -> vector<8x8xf32>
    %c0_68 = arith.constant 0 : index
    %c24 = arith.constant 24 : index
    %129 = vector.load %arg10[%c0_68, %c24] : memref<8x32xf32, #tpu.memory_space<vmem>>, vector<8x8xf32>
    %130 = vector.broadcast %117 : vector<8x1xf32> to vector<8x8xf32>
    %131 = arith.mulf %130, %129 : vector<8x8xf32>
    %132 = arith.addf %131, %128 : vector<8x8xf32>
    %c0_69 = arith.constant 0 : index
    %c24_70 = arith.constant 24 : index
    %133 = vector.load %arg10[%c0_69, %c24_70] : memref<8x32xf32, #tpu.memory_space<vmem>>, vector<8x8xf32>
    tpu.vector_store %arg10[%c0_69, %c24_70], %132 {strides = array<i32>} : memref<8x32xf32, #tpu.memory_space<vmem>>, vector<8x8xf32>,
    %c0_71 = arith.constant 0 : index
    %c3_72 = arith.constant 3 : index
    %134 = vector.load %arg8[%c0_71, %c3_72] : memref<8x4xf32, #tpu.memory_space<vmem>>, vector<8x1xf32>
    tpu.vector_store %arg8[%c0_71, %c3_72], %115 {strides = array<i32>} : memref<8x4xf32, #tpu.memory_space<vmem>>, vector<8x1xf32>,
    %c0_i32_73 = arith.constant 0 : i32
    %135 = arith.cmpi eq, %arg2, %c0_i32_73 : i32
    %136 = arith.extui %135 : i1 to i32
    %c0_i32_74 = arith.constant 0 : i32
    %137 = arith.cmpi ne, %136, %c0_i32_74 : i32
    scf.if %137 {
      %c0_75 = arith.constant 0 : index
      %c0_76 = arith.constant 0 : index
      %138 = vector.load %arg10[%c0_75, %c0_76] : memref<8x32xf32, #tpu.memory_space<vmem>>, vector<8x8xf32>
      %c0_77 = arith.constant 0 : index
      %c0_78 = arith.constant 0 : index
      %139 = vector.load %arg9[%c0_77, %c0_78] : memref<8x4xf32, #tpu.memory_space<vmem>>, vector<8x1xf32>
      %140 = vector.broadcast %139 : vector<8x1xf32> to vector<8x8xf32>
      %141 = arith.divf %138, %140 : vector<8x8xf32>
      %c0_79 = arith.constant 0 : index
      %c8_80 = arith.constant 8 : index
      %142 = vector.load %arg10[%c0_79, %c8_80] : memref<8x32xf32, #tpu.memory_space<vmem>>, vector<8x8xf32>
      %c0_81 = arith.constant 0 : index
      %c1_82 = arith.constant 1 : index
      %143 = vector.load %arg9[%c0_81, %c1_82] : memref<8x4xf32, #tpu.memory_space<vmem>>, vector<8x1xf32>
      %144 = vector.broadcast %143 : vector<8x1xf32> to vector<8x8xf32>
      %145 = arith.divf %142, %144 : vector<8x8xf32>
      %c0_83 = arith.constant 0 : index
      %c16_84 = arith.constant 16 : index
      %146 = vector.load %arg10[%c0_83, %c16_84] : memref<8x32xf32, #tpu.memory_space<vmem>>, vector<8x8xf32>
      %c0_85 = arith.constant 0 : index
      %c2_86 = arith.constant 2 : index
      %147 = vector.load %arg9[%c0_85, %c2_86] : memref<8x4xf32, #tpu.memory_space<vmem>>, vector<8x1xf32>
      %148 = vector.broadcast %147 : vector<8x1xf32> to vector<8x8xf32>
      %149 = arith.divf %146, %148 : vector<8x8xf32>
      %c0_87 = arith.constant 0 : index
      %c24_88 = arith.constant 24 : index
      %150 = vector.load %arg10[%c0_87, %c24_88] : memref<8x32xf32, #tpu.memory_space<vmem>>, vector<8x8xf32>
      %c0_89 = arith.constant 0 : index
      %c3_90 = arith.constant 3 : index
      %151 = vector.load %arg9[%c0_89, %c3_90] : memref<8x4xf32, #tpu.memory_space<vmem>>, vector<8x1xf32>
      %152 = vector.broadcast %151 : vector<8x1xf32> to vector<8x8xf32>
      %153 = arith.divf %150, %152 : vector<8x8xf32>
      %154 = tpu.concatenate %141, %145, %149, %153 in 1 : vector<8x8xf32>, vector<8x8xf32>, vector<8x8xf32>, vector<8x8xf32> -> vector<8x32xf32>
      %c0_91 = arith.constant 0 : index
      %c0_92 = arith.constant 0 : index
      %c0_93 = arith.constant 0 : index
      %155 = vector.load %arg7[%c0_91, %c0_92, %c0_93] : memref<1x8x32xf32, #tpu.memory_space<vmem>>, vector<1x8x32xf32>
      %156 = vector.shape_cast %155 : vector<1x8x32xf32> to vector<8x32xf32>
      %157 = vector.shape_cast %154 : vector<8x32xf32> to vector<1x8x32xf32>
      tpu.vector_store %arg7[%c0_91, %c0_92, %c0_93], %157 {strides = array<i32>} : memref<1x8x32xf32, #tpu.memory_space<vmem>>, vector<1x8x32xf32>,
    } else {
    }
    return
  }
  func.func @transform_0(%arg0: i32, %arg1: i32, %arg2: i32) -> (i32, i32, i32) {
    %c0_i32 = arith.constant 0 : i32
    %c0_i32_0 = arith.constant 0 : i32
    return %arg0, %arg1, %c0_i32 : i32, i32, i32
  }
  func.func @transform_1(%arg0: i32, %arg1: i32, %arg2: i32) -> (i32, i32, i32) {
    %c0_i32 = arith.constant 0 : i32
    %c0_i32_0 = arith.constant 0 : i32
    return %arg0, %arg2, %c0_i32 : i32, i32, i32
  }
  func.func @transform_2(%arg0: i32, %arg1: i32, %arg2: i32) -> (i32, i32, i32) {
    %c0_i32 = arith.constant 0 : i32
    %c0_i32_0 = arith.constant 0 : i32
    return %arg0, %arg2, %c0_i32 : i32, i32, i32
  }
  func.func @transform_3(%arg0: i32, %arg1: i32, %arg2: i32) -> (i32, i32, i32) {
    %c0_i32 = arith.constant 0 : i32
    %c0_i32_0 = arith.constant 0 : i32
    return %arg0, %c0_i32, %arg2 : i32, i32, i32
  }
  func.func @transform_4(%arg0: i32, %arg1: i32, %arg2: i32) -> (i32, i32, i32) {
    %c0_i32 = arith.constant 0 : i32
    %c0_i32_0 = arith.constant 0 : i32
    return %arg0, %arg1, %c0_i32 : i32, i32, i32
  }
}

module attributes {stable_mosaic.version = 11 : i64} {
  func.func @_add_layernorm_kernel(%arg0: i32, %arg1: memref<16x32xf32, #tpu.memory_space<vmem>>, %arg2: memref<16x32xf32, #tpu.memory_space<vmem>>, %arg3: memref<1x32xf32, #tpu.memory_space<vmem>>, %arg4: memref<1x32xf32, #tpu.memory_space<vmem>>, %arg5: memref<16x32xf32, #tpu.memory_space<vmem>>) attributes {dimension_semantics = [#tpu.dimension_semantics<parallel>], iteration_bounds = array<i64: 1>, scalar_prefetch = 0 : i64, scratch_operands = 0 : i64, tpu.core_type = #tpu.core_type<tc>, window_params = [{transform_indices = @transform_0, window_bounds = array<i64: 16, 32>}, {transform_indices = @transform_1, window_bounds = array<i64: 16, 32>}, {pipeline_mode = #tpu.pipeline_mode<synchronous>, transform_indices = @transform_2, window_bounds = array<i64: 1, 32>}, {pipeline_mode = #tpu.pipeline_mode<synchronous>, transform_indices = @transform_3, window_bounds = array<i64: 1, 32>}, {transform_indices = @transform_4, window_bounds = array<i64: 16, 32>}]} {
    %c0 = arith.constant 0 : index
    %c0_0 = arith.constant 0 : index
    %0 = vector.load %arg1[%c0, %c0_0] : memref<16x32xf32, #tpu.memory_space<vmem>>, vector<16x32xf32>
    %c0_1 = arith.constant 0 : index
    %c0_2 = arith.constant 0 : index
    %1 = vector.load %arg2[%c0_1, %c0_2] : memref<16x32xf32, #tpu.memory_space<vmem>>, vector<16x32xf32>
    %2 = arith.addf %0, %1 : vector<16x32xf32>
    %c0_3 = arith.constant 0 : index
    %c0_4 = arith.constant 0 : index
    %3 = vector.load %arg3[%c0_3, %c0_4] : memref<1x32xf32, #tpu.memory_space<vmem>>, vector<1x32xf32>
    %c0_5 = arith.constant 0 : index
    %c0_6 = arith.constant 0 : index
    %4 = vector.load %arg4[%c0_5, %c0_6] : memref<1x32xf32, #tpu.memory_space<vmem>>, vector<1x32xf32>
    %cst = arith.constant dense<0.000000e+00> : vector<16xf32>
    %5 = vector.multi_reduction <add>, %2, %cst [1] : vector<16x32xf32> to vector<16xf32>
    %6 = vector.shape_cast %5 : vector<16xf32> to vector<16x1xf32>
    %cst_7 = arith.constant 3.200000e+01 : f32
    %7 = vector.broadcast %cst_7 : f32 to vector<16x1xf32>
    %8 = arith.divf %6, %7 : vector<16x1xf32>
    %9 = vector.broadcast %8 : vector<16x1xf32> to vector<16x32xf32>
    %10 = arith.subf %2, %9 : vector<16x32xf32>
    %11 = arith.mulf %10, %10 : vector<16x32xf32>
    %cst_8 = arith.constant dense<0.000000e+00> : vector<16xf32>
    %12 = vector.multi_reduction <add>, %11, %cst_8 [1] : vector<16x32xf32> to vector<16xf32>
    %13 = vector.shape_cast %12 : vector<16xf32> to vector<16x1xf32>
    %cst_9 = arith.constant 3.200000e+01 : f32
    %14 = vector.broadcast %cst_9 : f32 to vector<16x1xf32>
    %15 = arith.divf %13, %14 : vector<16x1xf32>
    %16 = vector.broadcast %8 : vector<16x1xf32> to vector<16x32xf32>
    %17 = arith.subf %2, %16 : vector<16x32xf32>
    %cst_10 = arith.constant 9.99999996E-13 : f32
    %18 = vector.broadcast %cst_10 : f32 to vector<16x1xf32>
    %19 = arith.addf %15, %18 : vector<16x1xf32>
    %20 = math.rsqrt %19 : vector<16x1xf32>
    %21 = vector.broadcast %20 : vector<16x1xf32> to vector<16x32xf32>
    %22 = arith.mulf %17, %21 : vector<16x32xf32>
    %23 = vector.broadcast %3 : vector<1x32xf32> to vector<16x32xf32>
    %24 = arith.mulf %22, %23 : vector<16x32xf32>
    %25 = vector.broadcast %4 : vector<1x32xf32> to vector<16x32xf32>
    %26 = arith.addf %24, %25 : vector<16x32xf32>
    %c0_11 = arith.constant 0 : index
    %c0_12 = arith.constant 0 : index
    %27 = vector.load %arg5[%c0_11, %c0_12] : memref<16x32xf32, #tpu.memory_space<vmem>>, vector<16x32xf32>
    tpu.vector_store %arg5[%c0_11, %c0_12], %26 {strides = array<i32>} : memref<16x32xf32, #tpu.memory_space<vmem>>, vector<16x32xf32>,
    return
  }
  func.func @transform_0(%arg0: i32) -> (i32, i32) {
    %c0_i32 = arith.constant 0 : i32
    %c0_i32_0 = arith.constant 0 : i32
    return %arg0, %c0_i32 : i32, i32
  }
  func.func @transform_1(%arg0: i32) -> (i32, i32) {
    %c0_i32 = arith.constant 0 : i32
    %c0_i32_0 = arith.constant 0 : i32
    return %arg0, %c0_i32 : i32, i32
  }
  func.func @transform_2(%arg0: i32) -> (i32, i32) {
    %c0_i32 = arith.constant 0 : i32
    %c0_i32_0 = arith.constant 0 : i32
    %c0_i32_1 = arith.constant 0 : i32
    return %c0_i32, %c0_i32_0 : i32, i32
  }
  func.func @transform_3(%arg0: i32) -> (i32, i32) {
    %c0_i32 = arith.constant 0 : i32
    %c0_i32_0 = arith.constant 0 : i32
    %c0_i32_1 = arith.constant 0 : i32
    return %c0_i32, %c0_i32_0 : i32, i32
  }
  func.func @transform_4(%arg0: i32) -> (i32, i32) {
    %c0_i32 = arith.constant 0 : i32
    %c0_i32_0 = arith.constant 0 : i32
    return %arg0, %c0_i32 : i32, i32
  }
}

module attributes {stable_mosaic.version = 11 : i64} {
  func.func @_dense_kernel(%arg0: i32, %arg1: i32, %arg2: memref<16x32xbf16, #tpu.memory_space<vmem>>, %arg3: memref<32x128xbf16, #tpu.memory_space<vmem>>, %arg4: memref<1x128xf32, #tpu.memory_space<vmem>>, %arg5: memref<16x128xf32, #tpu.memory_space<vmem>>) attributes {dimension_semantics = [#tpu.dimension_semantics<parallel>, #tpu.dimension_semantics<parallel>], iteration_bounds = array<i64: 1, 1>, scalar_prefetch = 0 : i64, scratch_operands = 0 : i64, tpu.core_type = #tpu.core_type<tc>, window_params = [{transform_indices = @transform_0, window_bounds = array<i64: 16, 32>}, {transform_indices = @transform_1, window_bounds = array<i64: 32, 128>}, {transform_indices = @transform_2, window_bounds = array<i64: 1, 128>}, {transform_indices = @transform_3, window_bounds = array<i64: 16, 128>}]} {
    %c0 = arith.constant 0 : index
    %c0_0 = arith.constant 0 : index
    %0 = vector.load %arg2[%c0, %c0_0] : memref<16x32xbf16, #tpu.memory_space<vmem>>, vector<16x32xbf16>
    %c0_1 = arith.constant 0 : index
    %c0_2 = arith.constant 0 : index
    %1 = vector.load %arg3[%c0_1, %c0_2] : memref<32x128xbf16, #tpu.memory_space<vmem>>, vector<32x128xbf16>
    %cst = arith.constant dense<0.000000e+00> : vector<16x128xf32>
    %2 = tpu.matmul %0, %1, %cst {dimension_numbers = #tpu.dot_dimension_numbers<[1], [0], [0], [1], [0, 0, 1, 1], [], []>} : vector<16x32xbf16>, vector<32x128xbf16>, vector<16x128xf32> -> vector<16x128xf32>
    %c0_3 = arith.constant 0 : index
    %c0_4 = arith.constant 0 : index
    %3 = vector.load %arg4[%c0_3, %c0_4] : memref<1x128xf32, #tpu.memory_space<vmem>>, vector<1x128xf32>
    %4 = vector.broadcast %3 : vector<1x128xf32> to vector<16x128xf32>
    %5 = arith.addf %2, %4 : vector<16x128xf32>
    %cst_5 = arith.constant 5.000000e-01 : f32
    %6 = vector.broadcast %cst_5 : f32 to vector<16x128xf32>
    %7 = arith.mulf %6, %5 : vector<16x128xf32>
    %cst_6 = arith.constant 1.41421354 : f32
    %8 = vector.broadcast %cst_6 : f32 to vector<16x128xf32>
    %9 = arith.divf %5, %8 : vector<16x128xf32>
    %10 = math.erf %9 : vector<16x128xf32>
    %cst_7 = arith.constant 1.000000e+00 : f32
    %11 = vector.broadcast %cst_7 : f32 to vector<16x128xf32>
    %12 = arith.addf %11, %10 : vector<16x128xf32>
    %13 = arith.mulf %7, %12 : vector<16x128xf32>
    %c0_8 = arith.constant 0 : index
    %c0_9 = arith.constant 0 : index
    %14 = vector.load %arg5[%c0_8, %c0_9] : memref<16x128xf32, #tpu.memory_space<vmem>>, vector<16x128xf32>
    tpu.vector_store %arg5[%c0_8, %c0_9], %13 {strides = array<i32>} : memref<16x128xf32, #tpu.memory_space<vmem>>, vector<16x128xf32>,
    return
  }
  func.func @transform_0(%arg0: i32, %arg1: i32) -> (i32, i32) {
    %c0_i32 = arith.constant 0 : i32
    %c0_i32_0 = arith.constant 0 : i32
    return %arg0, %c0_i32 : i32, i32
  }
  func.func @transform_1(%arg0: i32, %arg1: i32) -> (i32, i32) {
    %c0_i32 = arith.constant 0 : i32
    %c0_i32_0 = arith.constant 0 : i32
    return %c0_i32, %arg1 : i32, i32
  }
  func.func @transform_2(%arg0: i32, %arg1: i32) -> (i32, i32) {
    %c0_i32 = arith.constant 0 : i32
    %c0_i32_0 = arith.constant 0 : i32
    return %c0_i32, %arg1 : i32, i32
  }
  func.func @transform_3(%arg0: i32, %arg1: i32) -> (i32, i32) {
    %c0_i32 = arith.constant 0 : i32
    return %arg0, %arg1 : i32, i32
  }
}

module attributes {stable_mosaic.version = 11 : i64} {
  func.func @_dense_kernel(%arg0: i32, %arg1: i32, %arg2: memref<16x64xbf16, #tpu.memory_space<vmem>>, %arg3: memref<64x128xbf16, #tpu.memory_space<vmem>>, %arg4: memref<1x128xf32, #tpu.memory_space<vmem>>, %arg5: memref<16x128xf32, #tpu.memory_space<vmem>>) attributes {dimension_semantics = [#tpu.dimension_semantics<parallel>, #tpu.dimension_semantics<parallel>], iteration_bounds = array<i64: 1, 1>, scalar_prefetch = 0 : i64, scratch_operands = 0 : i64, tpu.core_type = #tpu.core_type<tc>, window_params = [{transform_indices = @transform_0, window_bounds = array<i64: 16, 64>}, {transform_indices = @transform_1, window_bounds = array<i64: 64, 128>}, {transform_indices = @transform_2, window_bounds = array<i64: 1, 128>}, {transform_indices = @transform_3, window_bounds = array<i64: 16, 128>}]} {
    %c0 = arith.constant 0 : index
    %c0_0 = arith.constant 0 : index
    %0 = vector.load %arg2[%c0, %c0_0] : memref<16x64xbf16, #tpu.memory_space<vmem>>, vector<16x64xbf16>
    %c0_1 = arith.constant 0 : index
    %c0_2 = arith.constant 0 : index
    %1 = vector.load %arg3[%c0_1, %c0_2] : memref<64x128xbf16, #tpu.memory_space<vmem>>, vector<64x128xbf16>
    %cst = arith.constant dense<0.000000e+00> : vector<16x128xf32>
    %2 = tpu.matmul %0, %1, %cst {dimension_numbers = #tpu.dot_dimension_numbers<[1], [0], [0], [1], [0, 0, 1, 1], [], []>} : vector<16x64xbf16>, vector<64x128xbf16>, vector<16x128xf32> -> vector<16x128xf32>
    %c0_3 = arith.constant 0 : index
    %c0_4 = arith.constant 0 : index
    %3 = vector.load %arg4[%c0_3, %c0_4] : memref<1x128xf32, #tpu.memory_space<vmem>>, vector<1x128xf32>
    %4 = vector.broadcast %3 : vector<1x128xf32> to vector<16x128xf32>
    %5 = arith.addf %2, %4 : vector<16x128xf32>
    %c0_5 = arith.constant 0 : index
    %c0_6 = arith.constant 0 : index
    %6 = vector.load %arg5[%c0_5, %c0_6] : memref<16x128xf32, #tpu.memory_space<vmem>>, vector<16x128xf32>
    tpu.vector_store %arg5[%c0_5, %c0_6], %5 {strides = array<i32>} : memref<16x128xf32, #tpu.memory_space<vmem>>, vector<16x128xf32>,
    return
  }
  func.func @transform_0(%arg0: i32, %arg1: i32) -> (i32, i32) {
    %c0_i32 = arith.constant 0 : i32
    %c0_i32_0 = arith.constant 0 : i32
    return %arg0, %c0_i32 : i32, i32
  }
  func.func @transform_1(%arg0: i32, %arg1: i32) -> (i32, i32) {
    %c0_i32 = arith.constant 0 : i32
    %c0_i32_0 = arith.constant 0 : i32
    return %c0_i32, %arg1 : i32, i32
  }
  func.func @transform_2(%arg0: i32, %arg1: i32) -> (i32, i32) {
    %c0_i32 = arith.constant 0 : i32
    %c0_i32_0 = arith.constant 0 : i32
    return %c0_i32, %arg1 : i32, i32
  }
  func.func @transform_3(%arg0: i32, %arg1: i32) -> (i32, i32) {
    %c0_i32 = arith.constant 0 : i32
    return %arg0, %arg1 : i32, i32
  }
}

module attributes {stable_mosaic.version = 11 : i64} {
  func.func @_dense_kernel(%arg0: i32, %arg1: i32, %arg2: memref<8x32xbf16, #tpu.memory_space<vmem>>, %arg3: memref<32x128xbf16, #tpu.memory_space<vmem>>, %arg4: memref<1x128xf32, #tpu.memory_space<vmem>>, %arg5: memref<8x128xf32, #tpu.memory_space<vmem>>) attributes {dimension_semantics = [#tpu.dimension_semantics<parallel>, #tpu.dimension_semantics<parallel>], iteration_bounds = array<i64: 1, 1>, scalar_prefetch = 0 : i64, scratch_operands = 0 : i64, tpu.core_type = #tpu.core_type<tc>, window_params = [{transform_indices = @transform_0, window_bounds = array<i64: 8, 32>}, {transform_indices = @transform_1, window_bounds = array<i64: 32, 128>}, {transform_indices = @transform_2, window_bounds = array<i64: 1, 128>}, {transform_indices = @transform_3, window_bounds = array<i64: 8, 128>}]} {
    %c0 = arith.constant 0 : index
    %c0_0 = arith.constant 0 : index
    %0 = vector.load %arg2[%c0, %c0_0] : memref<8x32xbf16, #tpu.memory_space<vmem>>, vector<8x32xbf16>
    %c0_1 = arith.constant 0 : index
    %c0_2 = arith.constant 0 : index
    %1 = vector.load %arg3[%c0_1, %c0_2] : memref<32x128xbf16, #tpu.memory_space<vmem>>, vector<32x128xbf16>
    %cst = arith.constant dense<0.000000e+00> : vector<8x128xf32>
    %2 = tpu.matmul %0, %1, %cst {dimension_numbers = #tpu.dot_dimension_numbers<[1], [0], [0], [1], [0, 0, 1, 1], [], []>} : vector<8x32xbf16>, vector<32x128xbf16>, vector<8x128xf32> -> vector<8x128xf32>
    %c0_3 = arith.constant 0 : index
    %c0_4 = arith.constant 0 : index
    %3 = vector.load %arg4[%c0_3, %c0_4] : memref<1x128xf32, #tpu.memory_space<vmem>>, vector<1x128xf32>
    %4 = vector.broadcast %3 : vector<1x128xf32> to vector<8x128xf32>
    %5 = arith.addf %2, %4 : vector<8x128xf32>
    %6 = math.tanh %5 : vector<8x128xf32>
    %c0_5 = arith.constant 0 : index
    %c0_6 = arith.constant 0 : index
    %7 = vector.load %arg5[%c0_5, %c0_6] : memref<8x128xf32, #tpu.memory_space<vmem>>, vector<8x128xf32>
    tpu.vector_store %arg5[%c0_5, %c0_6], %6 {strides = array<i32>} : memref<8x128xf32, #tpu.memory_space<vmem>>, vector<8x128xf32>,
    return
  }
  func.func @transform_0(%arg0: i32, %arg1: i32) -> (i32, i32) {
    %c0_i32 = arith.constant 0 : i32
    %c0_i32_0 = arith.constant 0 : i32
    return %arg0, %c0_i32 : i32, i32
  }
  func.func @transform_1(%arg0: i32, %arg1: i32) -> (i32, i32) {
    %c0_i32 = arith.constant 0 : i32
    %c0_i32_0 = arith.constant 0 : i32
    return %c0_i32, %arg1 : i32, i32
  }
  func.func @transform_2(%arg0: i32, %arg1: i32) -> (i32, i32) {
    %c0_i32 = arith.constant 0 : i32
    %c0_i32_0 = arith.constant 0 : i32
    return %c0_i32, %arg1 : i32, i32
  }
  func.func @transform_3(%arg0: i32, %arg1: i32) -> (i32, i32) {
    %c0_i32 = arith.constant 0 : i32
    return %arg0, %arg1 : i32, i32
  }
}

module attributes {stable_mosaic.version = 11 : i64} {
  func.func @_dense_kernel(%arg0: i32, %arg1: i32, %arg2: memref<8x32xbf16, #tpu.memory_space<vmem>>, %arg3: memref<32x128xbf16, #tpu.memory_space<vmem>>, %arg4: memref<1x128xf32, #tpu.memory_space<vmem>>, %arg5: memref<8x128xf32, #tpu.memory_space<vmem>>) attributes {dimension_semantics = [#tpu.dimension_semantics<parallel>, #tpu.dimension_semantics<parallel>], iteration_bounds = array<i64: 1, 1>, scalar_prefetch = 0 : i64, scratch_operands = 0 : i64, tpu.core_type = #tpu.core_type<tc>, window_params = [{transform_indices = @transform_0, window_bounds = array<i64: 8, 32>}, {transform_indices = @transform_1, window_bounds = array<i64: 32, 128>}, {transform_indices = @transform_2, window_bounds = array<i64: 1, 128>}, {transform_indices = @transform_3, window_bounds = array<i64: 8, 128>}]} {
    %c0 = arith.constant 0 : index
    %c0_0 = arith.constant 0 : index
    %0 = vector.load %arg2[%c0, %c0_0] : memref<8x32xbf16, #tpu.memory_space<vmem>>, vector<8x32xbf16>
    %c0_1 = arith.constant 0 : index
    %c0_2 = arith.constant 0 : index
    %1 = vector.load %arg3[%c0_1, %c0_2] : memref<32x128xbf16, #tpu.memory_space<vmem>>, vector<32x128xbf16>
    %cst = arith.constant dense<0.000000e+00> : vector<8x128xf32>
    %2 = tpu.matmul %0, %1, %cst {dimension_numbers = #tpu.dot_dimension_numbers<[1], [0], [0], [1], [0, 0, 1, 1], [], []>} : vector<8x32xbf16>, vector<32x128xbf16>, vector<8x128xf32> -> vector<8x128xf32>
    %c0_3 = arith.constant 0 : index
    %c0_4 = arith.constant 0 : index
    %3 = vector.load %arg4[%c0_3, %c0_4] : memref<1x128xf32, #tpu.memory_space<vmem>>, vector<1x128xf32>
    %4 = vector.broadcast %3 : vector<1x128xf32> to vector<8x128xf32>
    %5 = arith.addf %2, %4 : vector<8x128xf32>
    %c0_5 = arith.constant 0 : index
    %c0_6 = arith.constant 0 : index
    %6 = vector.load %arg5[%c0_5, %c0_6] : memref<8x128xf32, #tpu.memory_space<vmem>>, vector<8x128xf32>
    tpu.vector_store %arg5[%c0_5, %c0_6], %5 {strides = array<i32>} : memref<8x128xf32, #tpu.memory_space<vmem>>, vector<8x128xf32>,
    return
  }
  func.func @transform_0(%arg0: i32, %arg1: i32) -> (i32, i32) {
    %c0_i32 = arith.constant 0 : i32
    %c0_i32_0 = arith.constant 0 : i32
    return %arg0, %c0_i32 : i32, i32
  }
  func.func @transform_1(%arg0: i32, %arg1: i32) -> (i32, i32) {
    %c0_i32 = arith.constant 0 : i32
    %c0_i32_0 = arith.constant 0 : i32
    return %c0_i32, %arg1 : i32, i32
  }
  func.func @transform_2(%arg0: i32, %arg1: i32) -> (i32, i32) {
    %c0_i32 = arith.constant 0 : i32
    %c0_i32_0 = arith.constant 0 : i32
    return %c0_i32, %arg1 : i32, i32
  }
  func.func @transform_3(%arg0: i32, %arg1: i32) -> (i32, i32) {
    %c0_i32 = arith.constant 0 : i32
    return %arg0, %arg1 : i32, i32
  }
}

</mosaic_0001>

<llo_original>
// kernel: _lambda_.21
$region0: #{_lambda_.21}
  #allocation0 [shape = 'u32[]', space=smem, size = 0x4, offset = 0x4, fixed_abs, tag = 'smem constant byte address 0x4 - core index']
  #allocation1 [shape = 'u32[72,128]{1,0:T(1,128)}', space=vmem, size = 0x9000, scoped, tag = 'internal scratch']
  %s0 = inlined_call_operand.vmem [shape: f32[16,32], index: 0, kind: input, shape index: {}]
  %s1 = inlined_call_operand.vmem [shape: f32[16,32], index: 1, kind: input, shape index: {}]
  %s2 = inlined_call_operand.vmem [shape: f32[1,32], index: 2, kind: input, shape index: {}]
  %s3 = inlined_call_operand.vmem [shape: f32[1,32], index: 3, kind: input, shape index: {}]
  %s4 = inlined_call_operand.vmem [shape: f32[16,32], index: 4, kind: output, shape index: {}]
  %s5 = sld [smem:[#allocation0]]
  $region26: #{_lambda_.21} parent=0
    _
  %s7 = ssub.s32 1, %s5
  %s8 = scalar_select 0, %s7, %s5
  // Predicated region
  $region2: #{_lambda_.21} parent=0 // pred_check
    _
  $region3: #{_lambda_.21} parent=0 // pred_check_branch
    %10 = sbr.rel (0) target = $region5
  $region4: #{_lambda_.21} parent=0 // pred_region
    _
  $region5: #{_lambda_.21} parent=0 // pred_fallthru
    _
  // Predicated region
  $region6: #{_lambda_.21} parent=0 // pred_check
    _
  $region7: #{_lambda_.21} parent=0 // pred_check_branch
    %12 = sbr.rel (0) target = $region9
  $region8: #{_lambda_.21} parent=0 // pred_region
    _
  $region9: #{_lambda_.21} parent=0 // pred_fallthru
    _
  // Predicated region
  $region10: #{_lambda_.21} parent=0 // pred_check
    _
  $region11: #{_lambda_.21} parent=0 // pred_check_branch
    %14 = sbr.rel (0) target = $region13
  $region12: #{_lambda_.21} parent=0 // pred_region
    _
  $region13: #{_lambda_.21} parent=0 // pred_fallthru
    _
  // Predicated region
  $region14: #{_lambda_.21} parent=0 // pred_check
    _
  $region15: #{_lambda_.21} parent=0 // pred_check_branch
    %16 = sbr.rel (0) target = $region17
  $region16: #{_lambda_.21} parent=0 // pred_region
    _
  $region17: #{_lambda_.21} parent=0 // pred_fallthru
    _
  %v17 = vld [vmem:[%s0] sm:$0xff]
  %v18 = vld [vmem:[%s0 + $0x8] sm:$0xff]
  %v19 = vld [vmem:[%s1] sm:$0xff]
  %v20 = vld [vmem:[%s1 + $0x8] sm:$0xff]
  %v21 = vadd.f32 %v17, %v19
  %v22 = vadd.f32 %v18, %v20
  %v23 = vld [vmem:[%s2] sm:$0x1]
  %v24 = vld [vmem:[%s3] sm:$0x1]
  %vm25 = vcmask 261120
  %v26 = vsel %vm25, %v21, 0.0
  %27 = vadd.xlane.f32.xlu0 %v26
  %v28 = vpop.xlane.xlu0 %27
  %v29 = vsel %vm25, %v22, 0.0
  %30 = vadd.xlane.f32.xlu0 %v29
  %v31 = vpop.xlane.xlu0 %30
  %v32 = vrcp.pop 32.0
  %v33 = vmul.f32 32.0, %v32
  %v34 = vsub.f32 1.0, %v33
  %v35 = vmul.f32 %v32, %v34
  %v36 = vadd.f32 %v32, %v35
  %vm37 = vweird.f32 %v32
  %v38 = vsel %vm37, %v32, %v36
  %v39 = vmul.f32 %v28, %v38
  %v40 = vmul.f32 %v31, %v38
  %v41 = vsub.f32 %v21, %v39
  %v42 = vsub.f32 %v22, %v40
  %v43 = vmul.f32 %v41, %v41
  %v44 = vmul.f32 %v42, %v42
  %v45 = vsel %vm25, %v43, 0.0
  %46 = vadd.xlane.f32.xlu0 %v45
  %v47 = vpop.xlane.xlu0 %46
  %v48 = vsel %vm25, %v44, 0.0
  %49 = vadd.xlane.f32.xlu0 %v48
  %v50 = vpop.xlane.xlu0 %49
  %v51 = vmul.f32 %v47, %v38
  %v52 = vmul.f32 %v50, %v38
  %v53 = vadd.f32 %v51, 1e-12
  %v54 = vadd.f32 %v52, 1e-12
  %v55 = vrsqrt.pop %v53
  %v56 = vmul.f32 %v55, %v53
  %v57 = vmul.f32 %v56, %v55
  %v58 = vmul.f32 0.5, %v57
  %v59 = vsub.f32 1.5, %v58
  %v60 = vmul.f32 %v55, %v59
  %vm61 = vweird.f32 %v53
  %vm62 = vweird.f32 %v55
  %vm63 = vmor %vm61, %vm62
  %v64 = vsel %vm63, %v55, %v60
  %v65 = vrsqrt.pop %v54
  %v66 = vmul.f32 %v65, %v54
  %v67 = vmul.f32 %v66, %v65
  %v68 = vmul.f32 0.5, %v67
  %v69 = vsub.f32 1.5, %v68
  %v70 = vmul.f32 %v65, %v69
  %vm71 = vweird.f32 %v54
  %vm72 = vweird.f32 %v65
  %vm73 = vmor %vm71, %vm72
  %v74 = vsel %vm73, %v65, %v70
  %v75 = vmul.f32 %v41, %v64
  %v76 = vmul.f32 %v42, %v74
  %v78 = vperm.slane %v23, 0
  %v80 = vmul.f32 %v75, %v78
  %v81 = vmul.f32 %v76, %v78
  %v83 = vperm.slane %v24, 0
  %v85 = vadd.f32 %v80, %v83
  %v86 = vadd.f32 %v81, %v83
  %87 = vst.msk [vmem:[%s4] sm:$0xff] %vm25, %v85
  %88 = vst.msk [vmem:[%s4 + $0x8] sm:$0xff] %vm25, %v86
  // Predicated region
  $region18: #{_lambda_.21} parent=0 // pred_check
    _
  $region19: #{_lambda_.21} parent=0 // pred_check_branch
    %90 = sbr.rel (0) target = $region21
  $region20: #{_lambda_.21} parent=0 // pred_region
    _
  $region21: #{_lambda_.21} parent=0 // pred_fallthru
    _
  // Predicated region
  $region22: #{_lambda_.21} parent=0 // pred_check
    _
  $region23: #{_lambda_.21} parent=0 // pred_check_branch
    %92 = sbr.rel (0) target = $region25
  $region24: #{_lambda_.21} parent=0 // pred_region
    _
  $region25: #{_lambda_.21} parent=0 // pred_fallthru
    _

// kernel: _lambda_.18
$region0: #{_lambda_.18}
  #allocation0 [shape = 'u32[]', space=smem, size = 0x4, offset = 0x4, fixed_abs, tag = 'smem constant byte address 0x4 - core index']
  #allocation1 [shape = 'u32[72,128]{1,0:T(1,128)}', space=vmem, size = 0x9000, scoped, tag = 'internal scratch']
  %s0 = inlined_call_operand.vmem [shape: bf16[16,32], index: 0, kind: input, shape index: {}]
  %s1 = inlined_call_operand.vmem [shape: bf16[32,128], index: 1, kind: input, shape index: {}]
  %s2 = inlined_call_operand.vmem [shape: f32[1,128], index: 2, kind: input, shape index: {}]
  %s3 = inlined_call_operand.vmem [shape: f32[16,128], index: 3, kind: output, shape index: {}]
  %s4 = sld [smem:[#allocation0]]
  $region22: #{_lambda_.18} parent=0
    _
  %s6 = ssub.s32 1, %s4
  %s7 = scalar_select 0, %s6, %s4
  // Predicated region
  $region2: #{_lambda_.18} parent=0 // pred_check
    _
  $region3: #{_lambda_.18} parent=0 // pred_check_branch
    %9 = sbr.rel (0) target = $region5
  $region4: #{_lambda_.18} parent=0 // pred_region
    _
  $region5: #{_lambda_.18} parent=0 // pred_fallthru
    _
  // Predicated region
  $region6: #{_lambda_.18} parent=0 // pred_check
    _
  $region7: #{_lambda_.18} parent=0 // pred_check_branch
    %11 = sbr.rel (0) target = $region9
  $region8: #{_lambda_.18} parent=0 // pred_region
    _
  $region9: #{_lambda_.18} parent=0 // pred_fallthru
    _
  // Predicated region
  $region10: #{_lambda_.18} parent=0 // pred_check
    _
  $region11: #{_lambda_.18} parent=0 // pred_check_branch
    %13 = sbr.rel (0) target = $region13
  $region12: #{_lambda_.18} parent=0 // pred_region
    _
  $region13: #{_lambda_.18} parent=0 // pred_fallthru
    _
  %v15 = vld [vmem:[%s0] sm:$0xf]
  %v16 = vld [vmem:[%s0 + $0x4] sm:$0xf]
  %v17 = vld [vmem:[%s1] sm:$0xf]
  %v18 = vld [vmem:[%s1 + $0x4] sm:$0xf]
  %v19 = vld [vmem:[%s1 + $0x8] sm:$0xf]
  %v20 = vld [vmem:[%s1 + $0xc] sm:$0xf]
  %v21 = vld [vmem:[%s2] sm:$0x1]
  %v23 = vperm.slane %v21, 0
  %v27 = vunpack.c.l.b16 %v15
  %v28 = vunpack.c.l.b16 %v16
  %v29 = vpack.c.b16 %v28, %v27
  %v34 = vunpack.c.l.b16 %v17
  %v35 = vunpack.c.l.b16 %v18
  %v36 = vunpack.c.l.b16 %v19
  %v37 = vunpack.c.l.b16 %v20
  %v38 = vpack.c.b16 %v35, %v34
  %v39 = vpack.c.b16 %v37, %v36
  %vm42 = vcmask 261120
  %v44 = vsel %vm42, %v29, 0
  %46 = vmatpush.bf16.msra.mxu0 0
  %47 = vmatpush.bf16.msra.mxu0 0
  %48 = vmatpush.bf16.msra.mxu0 0
  %49 = vmatpush.bf16.msra.mxu0 0
  %50 = vmatpush.bf16.msra.mxu0 0
  %51 = vmatpush.bf16.msra.mxu0 0
  %52 = vmatpush.bf16.msra.mxu0 %v39
  %53 = vmatpush.bf16.msra.mxu0 %v38
  %54 = vmatmul.bf16.gmra.mxu0 %v44
  %v55 = vpop.f32.mrf.mxu0
  %v56 = vadd.f32 %v23, %v55
  %v57 = vpop.f32.mrf.mxu0
  %v58 = vadd.f32 %v23, %v57
  %59 = vdwg.mxu0
  %60 = vst [vmem:[%s3] sm:$0xff] %v56
  %61 = vst [vmem:[%s3 + $0x8] sm:$0xff] %v58
  // Predicated region
  $region14: #{_lambda_.18} parent=0 // pred_check
    _
  $region15: #{_lambda_.18} parent=0 // pred_check_branch
    %63 = sbr.rel (0) target = $region17
  $region16: #{_lambda_.18} parent=0 // pred_region
    _
  $region17: #{_lambda_.18} parent=0 // pred_fallthru
    _
  // Predicated region
  $region18: #{_lambda_.18} parent=0 // pred_check
    _
  $region19: #{_lambda_.18} parent=0 // pred_check_branch
    %65 = sbr.rel (0) target = $region21
  $region20: #{_lambda_.18} parent=0 // pred_region
    _
  $region21: #{_lambda_.18} parent=0 // pred_fallthru
    _

// kernel: _lambda_.17
$region0: #{_lambda_.17}
  #allocation0 [shape = 'u32[]', space=smem, size = 0x4, offset = 0x4, fixed_abs, tag = 'smem constant byte address 0x4 - core index']
  #allocation1 [shape = 'u32[72,128]{1,0:T(1,128)}', space=vmem, size = 0x9000, scoped, tag = 'internal scratch']
  %s0 = inlined_call_operand.vmem [shape: f32[16,32], index: 0, kind: input, shape index: {}]
  %s1 = inlined_call_operand.vmem [shape: f32[1,32], index: 1, kind: input, shape index: {}]
  %s2 = inlined_call_operand.vmem [shape: f32[1,32], index: 2, kind: input, shape index: {}]
  %s3 = inlined_call_operand.vmem [shape: f32[16,32], index: 3, kind: output, shape index: {}]
  %s4 = sld [smem:[#allocation0]]
  $region22: #{_lambda_.17} parent=0
    _
  %s6 = ssub.s32 1, %s4
  %s7 = scalar_select 0, %s6, %s4
  // Predicated region
  $region2: #{_lambda_.17} parent=0 // pred_check
    _
  $region3: #{_lambda_.17} parent=0 // pred_check_branch
    %9 = sbr.rel (0) target = $region5
  $region4: #{_lambda_.17} parent=0 // pred_region
    _
  $region5: #{_lambda_.17} parent=0 // pred_fallthru
    _
  // Predicated region
  $region6: #{_lambda_.17} parent=0 // pred_check
    _
  $region7: #{_lambda_.17} parent=0 // pred_check_branch
    %11 = sbr.rel (0) target = $region9
  $region8: #{_lambda_.17} parent=0 // pred_region
    _
  $region9: #{_lambda_.17} parent=0 // pred_fallthru
    _
  // Predicated region
  $region10: #{_lambda_.17} parent=0 // pred_check
    _
  $region11: #{_lambda_.17} parent=0 // pred_check_branch
    %13 = sbr.rel (0) target = $region13
  $region12: #{_lambda_.17} parent=0 // pred_region
    _
  $region13: #{_lambda_.17} parent=0 // pred_fallthru
    _
  %v14 = vld [vmem:[%s0] sm:$0xff]
  %v15 = vld [vmem:[%s0 + $0x8] sm:$0xff]
  %v16 = vld [vmem:[%s1] sm:$0x1]
  %v17 = vld [vmem:[%s2] sm:$0x1]
  %vm18 = vcmask 261120
  %v19 = vsel %vm18, %v14, 0.0
  %20 = vadd.xlane.f32.xlu0 %v19
  %v21 = vpop.xlane.xlu0 %20
  %v22 = vsel %vm18, %v15, 0.0
  %23 = vadd.xlane.f32.xlu0 %v22
  %v24 = vpop.xlane.xlu0 %23
  %v25 = vrcp.pop 32.0
  %v26 = vmul.f32 32.0, %v25
  %v27 = vsub.f32 1.0, %v26
  %v28 = vmul.f32 %v25, %v27
  %v29 = vadd.f32 %v25, %v28
  %vm30 = vweird.f32 %v25
  %v31 = vsel %vm30, %v25, %v29
  %v32 = vmul.f32 %v21, %v31
  %v33 = vmul.f32 %v24, %v31
  %v34 = vsub.f32 %v14, %v32
  %v35 = vsub.f32 %v15, %v33
  %v36 = vmul.f32 %v34, %v34
  %v37 = vmul.f32 %v35, %v35
  %v38 = vsel %vm18, %v36, 0.0
  %39 = vadd.xlane.f32.xlu0 %v38
  %v40 = vpop.xlane.xlu0 %39
  %v41 = vsel %vm18, %v37, 0.0
  %42 = vadd.xlane.f32.xlu0 %v41
  %v43 = vpop.xlane.xlu0 %42
  %v44 = vmul.f32 %v40, %v31
  %v45 = vmul.f32 %v43, %v31
  %v46 = vadd.f32 %v44, 1e-12
  %v47 = vadd.f32 %v45, 1e-12
  %v48 = vrsqrt.pop %v46
  %v49 = vmul.f32 %v48, %v46
  %v50 = vmul.f32 %v49, %v48
  %v51 = vmul.f32 0.5, %v50
  %v52 = vsub.f32 1.5, %v51
  %v53 = vmul.f32 %v48, %v52
  %vm54 = vweird.f32 %v46
  %vm55 = vweird.f32 %v48
  %vm56 = vmor %vm54, %vm55
  %v57 = vsel %vm56, %v48, %v53
  %v58 = vrsqrt.pop %v47
  %v59 = vmul.f32 %v58, %v47
  %v60 = vmul.f32 %v59, %v58
  %v61 = vmul.f32 0.5, %v60
  %v62 = vsub.f32 1.5, %v61
  %v63 = vmul.f32 %v58, %v62
  %vm64 = vweird.f32 %v47
  %vm65 = vweird.f32 %v58
  %vm66 = vmor %vm64, %vm65
  %v67 = vsel %vm66, %v58, %v63
  %v68 = vmul.f32 %v34, %v57
  %v69 = vmul.f32 %v35, %v67
  %v71 = vperm.slane %v16, 0
  %v73 = vmul.f32 %v68, %v71
  %v74 = vmul.f32 %v69, %v71
  %v76 = vperm.slane %v17, 0
  %v78 = vadd.f32 %v73, %v76
  %v79 = vadd.f32 %v74, %v76
  %80 = vst.msk [vmem:[%s3] sm:$0xff] %vm18, %v78
  %81 = vst.msk [vmem:[%s3 + $0x8] sm:$0xff] %vm18, %v79
  // Predicated region
  $region14: #{_lambda_.17} parent=0 // pred_check
    _
  $region15: #{_lambda_.17} parent=0 // pred_check_branch
    %83 = sbr.rel (0) target = $region17
  $region16: #{_lambda_.17} parent=0 // pred_region
    _
  $region17: #{_lambda_.17} parent=0 // pred_fallthru
    _
  // Predicated region
  $region18: #{_lambda_.17} parent=0 // pred_check
    _
  $region19: #{_lambda_.17} parent=0 // pred_check_branch
    %85 = sbr.rel (0) target = $region21
  $region20: #{_lambda_.17} parent=0 // pred_region
    _
  $region21: #{_lambda_.17} parent=0 // pred_fallthru
    _

// kernel: _lambda_.19
$region0: #{_lambda_.19}
  #allocation0 [shape = 'u32[]', space=smem, size = 0x4, offset = 0x4, fixed_abs, tag = 'smem constant byte address 0x4 - core index']
  #allocation1 [shape = 'u32[72,128]{1,0:T(1,128)}', space=vmem, size = 0x9000, scoped, tag = 'internal scratch']
  #allocation2 [shape = 'f32[8,4]{1,0:T(8,128)}', space=vmem, size = 0x1000, scoped, tag = 'scratch operand']
  #allocation3 [shape = 'f32[8,4]{1,0:T(8,128)}', space=vmem, size = 0x1000, scoped, tag = 'scratch operand']
  #allocation4 [shape = 'f32[8,32]{1,0:T(8,128)}', space=vmem, size = 0x1000, scoped, tag = 'scratch operand']
  %s0 = inlined_call_operand.vmem [shape: bf16[2,8,32], index: 0, kind: input, shape index: {}]
  %s1 = inlined_call_operand.vmem [shape: bf16[2,8,32], index: 1, kind: input, shape index: {}]
  %s2 = inlined_call_operand.vmem [shape: bf16[2,8,32], index: 2, kind: input, shape index: {}]
  %s3 = inlined_call_operand.vmem [shape: f32[2,1,8], index: 3, kind: input, shape index: {}]
  %s4 = inlined_call_operand.vmem [shape: f32[2,8,32], index: 4, kind: output, shape index: {}]
  %s5 = sld [smem:[#allocation0]]
  $region57: #{_lambda_.19} parent=0
    _
  %s7 = ssub.s32 1, %s5
  %s8 = scalar_select 0, %s7, %s5
  loop: start=0, step=1, limit=4
  $region2: #{_lambda_.19} parent=0 // loop_pre_header
    _
  $region3: #{_lambda_.19} parent=0 // loop_header
    %s10 = sphi 0, %s14
    %p11 = scmp.ge.s32.totalorder %s10, 4
    %s17 = sphi 0, %s36
    %s18 = sphi 0, %s32
    %s19 = sphi 0, %s28
    %s20 = sphi 0, %s17
    %s21 = sphi 0, %s18
    %s22 = sphi 0, %s19
    %s23 = sphi 0, %s20
    %s24 = sphi 0, %s21
    %s25 = sphi 0, %s22
    %s41 = sphi 0, %s43
    %s44 = sphi 0, %s41
    %s45 = sphi 0, %s44
    %s61 = sphi 0, %s45
    %s69 = sphi 0, %s71
    %s72 = sphi 0, %s69
    %s73 = sphi 0, %s72
    %s89 = sphi 0, %s73
    %s97 = sphi 0, %s99
    %s100 = sphi 0, %s97
    %s101 = sphi 0, %s100
    %s117 = sphi 0, %s101
    %s125 = sphi 0, %s127
    %s128 = sphi 0, %s125
    %s129 = sphi 0, %s128
    %s145 = sphi 0, %s129
    %s153 = sphi 0, %s155
    %s156 = sphi 0, %s153
    %s157 = sphi 0, %s156
    %s173 = sphi 0, %s157
  $region4: #{_lambda_.19} parent=0 // loop_header_branch
    %13 = sbr.rel (%p11) target = $region8
  $region5: #{_lambda_.19} parent=0 // loop_body
    %s15 = ssub.s32 %s10, 1
    %s16 = ssub.s32 %s10, 2
    %s26 = sadd.s32 1, %s19
    %p27 = scmp.ge.s32.totalorder %s26, 1
    %s28 = scalar_select %p27, 0, %s26
    %s29 = sadd.s32 1, %s18
    %s30 = scalar_select %p27, %s29, %s18
    %p31 = scmp.ge.s32.totalorder %s30, 1
    %s32 = scalar_select %p31, 0, %s30
    %s33 = sadd.s32 1, %s17
    %s34 = scalar_select %p31, %s33, %s17
    %p35 = scmp.ge.s32.totalorder %s34, 2
    %s36 = scalar_select %p35, 0, %s34
    %s37 = ssub.s32 %s17, %s36
    %s38 = ssub.s32 %s18, %s32
    %s39 = sor.u32 %s37, %s38
    %p40 = scmp.eq.s32.totalorder %s39, 0
    %s42 = sadd.s32 %s41, 1
    %s43 = scalar_select %p40, %s41, %s42
    %p46 = pneg %p40
    %p47 = scmp.eq.s32.totalorder %s10, 1
    %p48 = por %p46, %p47
    %p49 = scmp.ne.s32.totalorder %s41, %s44
    %p50 = scmp.eq.s32.totalorder %s10, 0
    %p51 = por %p49, %p50
    %p52 = scmp.ne.s32.totalorder %s41, %s44
    %p53 = scmp.eq.s32.totalorder %s15, 1
    %p54 = por %p52, %p53
    %p55 = scmp.ne.s32.totalorder %s44, %s45
    %p56 = scmp.eq.s32.totalorder %s15, 0
    %p57 = por %p55, %p56
    %p58 = scmp.ne.s32.totalorder %s44, %s45
    %p59 = scmp.eq.s32.totalorder %s16, 1
    %p60 = por %p58, %p59
    %p62 = scmp.ne.s32.totalorder %s45, %s61
    %p63 = scmp.eq.s32.totalorder %s16, 0
    %p64 = por %p62, %p63
    %s65 = ssub.s32 %s17, %s36
    %s66 = ssub.s32 %s19, %s28
    %s67 = sor.u32 %s65, %s66
    %p68 = scmp.eq.s32.totalorder %s67, 0
    %s70 = sadd.s32 %s69, 1
    %s71 = scalar_select %p68, %s69, %s70
    %p74 = pneg %p68
    %p75 = scmp.eq.s32.totalorder %s10, 1
    %p76 = por %p74, %p75
    %p77 = scmp.ne.s32.totalorder %s69, %s72
    %p78 = scmp.eq.s32.totalorder %s10, 0
    %p79 = por %p77, %p78
    %p80 = scmp.ne.s32.totalorder %s69, %s72
    %p81 = scmp.eq.s32.totalorder %s15, 1
    %p82 = por %p80, %p81
    %p83 = scmp.ne.s32.totalorder %s72, %s73
    %p84 = scmp.eq.s32.totalorder %s15, 0
    %p85 = por %p83, %p84
    %p86 = scmp.ne.s32.totalorder %s72, %s73
    %p87 = scmp.eq.s32.totalorder %s16, 1
    %p88 = por %p86, %p87
    %p90 = scmp.ne.s32.totalorder %s73, %s89
    %p91 = scmp.eq.s32.totalorder %s16, 0
    %p92 = por %p90, %p91
    %s93 = ssub.s32 %s17, %s36
    %s94 = ssub.s32 %s19, %s28
    %s95 = sor.u32 %s93, %s94
    %p96 = scmp.eq.s32.totalorder %s95, 0
    %s98 = sadd.s32 %s97, 1
    %s99 = scalar_select %p96, %s97, %s98
    %p102 = pneg %p96
    %p103 = scmp.eq.s32.totalorder %s10, 1
    %p104 = por %p102, %p103
    %p105 = scmp.ne.s32.totalorder %s97, %s100
    %p106 = scmp.eq.s32.totalorder %s10, 0
    %p107 = por %p105, %p106
    %p108 = scmp.ne.s32.totalorder %s97, %s100
    %p109 = scmp.eq.s32.totalorder %s15, 1
    %p110 = por %p108, %p109
    %p111 = scmp.ne.s32.totalorder %s100, %s101
    %p112 = scmp.eq.s32.totalorder %s15, 0
    %p113 = por %p111, %p112
    %p114 = scmp.ne.s32.totalorder %s100, %s101
    %p115 = scmp.eq.s32.totalorder %s16, 1
    %p116 = por %p114, %p115
    %p118 = scmp.ne.s32.totalorder %s101, %s117
    %p119 = scmp.eq.s32.totalorder %s16, 0
    %p120 = por %p118, %p119
    %s121 = ssub.s32 %s17, %s36
    %s122 = ssub.s32 %s19, %s28
    %s123 = sor.u32 %s121, %s122
    %p124 = scmp.eq.s32.totalorder %s123, 0
    %s126 = sadd.s32 %s125, 1
    %s127 = scalar_select %p124, %s125, %s126
    %p130 = pneg %p124
    %p131 = scmp.eq.s32.totalorder %s10, 1
    %p132 = por %p130, %p131
    %p133 = scmp.ne.s32.totalorder %s125, %s128
    %p134 = scmp.eq.s32.totalorder %s10, 0
    %p135 = por %p133, %p134
    %p136 = scmp.ne.s32.totalorder %s125, %s128
    %p137 = scmp.eq.s32.totalorder %s15, 1
    %p138 = por %p136, %p137
    %p139 = scmp.ne.s32.totalorder %s128, %s129
    %p140 = scmp.eq.s32.totalorder %s15, 0
    %p141 = por %p139, %p140
    %p142 = scmp.ne.s32.totalorder %s128, %s129
    %p143 = scmp.eq.s32.totalorder %s16, 1
    %p144 = por %p142, %p143
    %p146 = scmp.ne.s32.totalorder %s129, %s145
    %p147 = scmp.eq.s32.totalorder %s16, 0
    %p148 = por %p146, %p147
    %s149 = ssub.s32 %s17, %s36
    %s150 = ssub.s32 %s18, %s32
    %s151 = sor.u32 %s149, %s150
    %p152 = scmp.eq.s32.totalorder %s151, 0
    %s154 = sadd.s32 %s153, 1
    %s155 = scalar_select %p152, %s153, %s154
    %p158 = pneg %p152
    %p159 = scmp.eq.s32.totalorder %s10, 1
    %p160 = por %p158, %p159
    %p161 = scmp.ne.s32.totalorder %s153, %s156
    %p162 = scmp.eq.s32.totalorder %s10, 0
    %p163 = por %p161, %p162
    %p164 = scmp.ne.s32.totalorder %s153, %s156
    %p165 = scmp.eq.s32.totalorder %s15, 1
    %p166 = por %p164, %p165
    %p167 = scmp.ne.s32.totalorder %s156, %s157
    %p168 = scmp.eq.s32.totalorder %s15, 0
    %p169 = por %p167, %p168
    %p170 = scmp.ne.s32.totalorder %s156, %s157
    %p171 = scmp.eq.s32.totalorder %s16, 1
    %p172 = por %p170, %p171
    %p174 = scmp.ne.s32.totalorder %s157, %s173
    %p175 = scmp.eq.s32.totalorder %s16, 0
    %p176 = por %p174, %p175
    %p177 = scmp.le.s32.totalorder 1, %s10
    %p178 = scmp.lt.s32.totalorder %s10, 3
    %p179 = pnand %p177, %p178
    %p180 = pneg %p179
    // Predicated region
    $region9: #{_lambda_.19} parent=5 // pred_check
      _
    $region10: #{_lambda_.19} parent=5 // pred_check_branch
      %182 = sbr.rel (%p179) target = $region12
    $region11: #{_lambda_.19} parent=5 // pred_region
      %s183 = ssub.s32 %s10, 1
    $region12: #{_lambda_.19} parent=5 // pred_fallthru
      _
    %p184 = scmp.lt.s32.totalorder %s10, 2
    // Predicated region
    $region13: #{_lambda_.19} parent=5 // pred_check
      %p185 = pneg %p184
    $region14: #{_lambda_.19} parent=5 // pred_check_branch
      %187 = sbr.rel (%p185) target = $region16
    $region15: #{_lambda_.19} parent=5 // pred_region
      // Predicated region
      $region17: #{_lambda_.19} parent=15 // pred_check
        %p188 = pneg %p51
      $region18: #{_lambda_.19} parent=15 // pred_check_branch
        %190 = sbr.rel (%p188) target = $region20
      $region19: #{_lambda_.19} parent=15 // pred_region
        %p191 = scmp.lt.s32.totalorder %s17, 1
        %s192 = scalar_select %p191, %s17, 1
        %p193 = scmp.lt.s32.totalorder %s18, 0
        %s194 = scalar_select %p193, %s18, 0
        %s195 = sadd.s32 %s194, %s192
        %s196 = smul.addr %s195, 4
        %s197 = scalar_lea.vmem %s0, %s196
      $region20: #{_lambda_.19} parent=15 // pred_fallthru
        _
      // Predicated region
      $region21: #{_lambda_.19} parent=15 // pred_check
        %p198 = pneg %p79
      $region22: #{_lambda_.19} parent=15 // pred_check_branch
        %200 = sbr.rel (%p198) target = $region24
      $region23: #{_lambda_.19} parent=15 // pred_region
        %p201 = scmp.lt.s32.totalorder %s17, 1
        %s202 = scalar_select %p201, %s17, 1
        %p203 = scmp.lt.s32.totalorder %s19, 0
        %s204 = scalar_select %p203, %s19, 0
        %s205 = sadd.s32 %s204, %s202
        %s206 = smul.addr %s205, 4
        %s207 = scalar_lea.vmem %s1, %s206
      $region24: #{_lambda_.19} parent=15 // pred_fallthru
        _
      // Predicated region
      $region25: #{_lambda_.19} parent=15 // pred_check
        %p208 = pneg %p107
      $region26: #{_lambda_.19} parent=15 // pred_check_branch
        %210 = sbr.rel (%p208) target = $region28
      $region27: #{_lambda_.19} parent=15 // pred_region
        %p211 = scmp.lt.s32.totalorder %s17, 1
        %s212 = scalar_select %p211, %s17, 1
        %p213 = scmp.lt.s32.totalorder %s19, 0
        %s214 = scalar_select %p213, %s19, 0
        %s215 = sadd.s32 %s214, %s212
        %s216 = smul.addr %s215, 4
        %s217 = scalar_lea.vmem %s2, %s216
      $region28: #{_lambda_.19} parent=15 // pred_fallthru
        _
      // Predicated region
      $region29: #{_lambda_.19} parent=15 // pred_check
        %p218 = pneg %p135
      $region30: #{_lambda_.19} parent=15 // pred_check_branch
        %220 = sbr.rel (%p218) target = $region32
      $region31: #{_lambda_.19} parent=15 // pred_region
        %p221 = scmp.lt.s32.totalorder %s17, 1
        %s222 = scalar_select %p221, %s17, 1
        %p223 = scmp.lt.s32.totalorder %s19, 0
        %s224 = scalar_select %p223, %s19, 0
        %s225 = sadd.s32 %s224, %s222
        %s226 = scalar_lea.vmem %s3, %s225
      $region32: #{_lambda_.19} parent=15 // pred_fallthru
        _
    $region16: #{_lambda_.19} parent=5 // pred_fallthru
      _
    %p227 = scmp.le.s32.totalorder 1, %s10
    %p228 = scmp.lt.s32.totalorder %s10, 3
    %p229 = pnand %p227, %p228
    %p230 = pneg %p229
    // Predicated region
    $region33: #{_lambda_.19} parent=5 // pred_check
      _
    $region34: #{_lambda_.19} parent=5 // pred_check_branch
      %232 = sbr.rel (%p229) target = $region36
    $region35: #{_lambda_.19} parent=5 // pred_region
      %s233 = ssub.s32 %s10, 1
      %p234 = scmp.lt.s32.totalorder %s20, 1
      %s235 = scalar_select %p234, %s20, 1
      %p236 = scmp.lt.s32.totalorder %s21, 0
      %s237 = scalar_select %p236, %s21, 0
      %s238 = sadd.s32 %s237, %s235
      %s239 = smul.addr %s238, 4
      %s240 = scalar_lea.vmem %s0, %s239
      %p241 = pneg %p57
      %p242 = pneg %p54
      %p243 = scmp.lt.s32.totalorder %s20, 1
      %s244 = scalar_select %p243, %s20, 1
      %p245 = scmp.lt.s32.totalorder %s22, 0
      %s246 = scalar_select %p245, %s22, 0
      %s247 = sadd.s32 %s246, %s244
      %s248 = smul.addr %s247, 4
      %s249 = scalar_lea.vmem %s1, %s248
      %p250 = pneg %p85
      %p251 = pneg %p82
      %p252 = scmp.lt.s32.totalorder %s20, 1
      %s253 = scalar_select %p252, %s20, 1
      %p254 = scmp.lt.s32.totalorder %s22, 0
      %s255 = scalar_select %p254, %s22, 0
      %s256 = sadd.s32 %s255, %s253
      %s257 = smul.addr %s256, 4
      %s258 = scalar_lea.vmem %s2, %s257
      %p259 = pneg %p113
      %p260 = pneg %p110
      %p261 = scmp.lt.s32.totalorder %s20, 1
      %s262 = scalar_select %p261, %s20, 1
      %p263 = scmp.lt.s32.totalorder %s22, 0
      %s264 = scalar_select %p263, %s22, 0
      %s265 = sadd.s32 %s264, %s262
      %s266 = scalar_lea.vmem %s3, %s265
      %p267 = pneg %p141
      %p268 = pneg %p138
      %p269 = pneg %p169
      %p270 = pneg %p166
      %p271 = scmp.lt.s32.totalorder %s20, 1
      %s272 = scalar_select %p271, %s20, 1
      %p273 = scmp.lt.s32.totalorder %s21, 0
      %s274 = scalar_select %p273, %s21, 0
      %s275 = sadd.s32 %s274, %s272
      %s276 = smul.addr %s275, 8
      %s277 = scalar_lea.vmem %s4, %s276
      %p278 = scmp.lt.s32.totalorder %s20, 1
      %s279 = scalar_select %p278, %s20, 1
      %p280 = scmp.lt.s32.totalorder %s21, 0
      %s281 = scalar_select %p280, %s21, 0
      %s282 = sadd.s32 %s281, %s279
      %s283 = smul.addr %s282, 4
      %s284 = scalar_lea.vmem %s0, %s283
      %p285 = scmp.lt.s32.totalorder %s20, 1
      %s286 = scalar_select %p285, %s20, 1
      %p287 = scmp.lt.s32.totalorder %s22, 0
      %s288 = scalar_select %p287, %s22, 0
      %s289 = sadd.s32 %s288, %s286
      %s290 = smul.addr %s289, 4
      %s291 = scalar_lea.vmem %s1, %s290
      %p292 = scmp.lt.s32.totalorder %s20, 1
      %s293 = scalar_select %p292, %s20, 1
      %p294 = scmp.lt.s32.totalorder %s22, 0
      %s295 = scalar_select %p294, %s22, 0
      %s296 = sadd.s32 %s295, %s293
      %s297 = smul.addr %s296, 4
      %s298 = scalar_lea.vmem %s2, %s297
      %p299 = scmp.lt.s32.totalorder %s20, 1
      %s300 = scalar_select %p299, %s20, 1
      %p301 = scmp.lt.s32.totalorder %s22, 0
      %s302 = scalar_select %p301, %s22, 0
      %s303 = sadd.s32 %s302, %s300
      %s304 = scalar_lea.vmem %s3, %s303
      %p305 = scmp.lt.s32.totalorder %s20, 1
      %s306 = scalar_select %p305, %s20, 1
      %p307 = scmp.lt.s32.totalorder %s21, 0
      %s308 = scalar_select %p307, %s21, 0
      %s309 = sadd.s32 %s308, %s306
      %s310 = smul.addr %s309, 8
      %s311 = scalar_lea.vmem %s4, %s310
      %p313 = scmp.eq.s32.totalorder %s22, 0
      // Predicated region
      $region37: #{_lambda_.19} parent=35 // pred_check
        %p314 = pneg %p313
      $region38: #{_lambda_.19} parent=35 // pred_check_branch
        %316 = sbr.rel (%p314) target = $region40
      $region39: #{_lambda_.19} parent=35 // pred_region
        %vm317 = vcmask 31744
        %318 = vst.msk [vmem:[#allocation2] sm:$0xff] %vm317, -1e+30
        %319 = vst.msk [vmem:[#allocation3] sm:$0xff] %vm317, 0.0
        %vm320 = vcmask 261120
        %321 = vst.msk [vmem:[#allocation4] sm:$0xff] %vm320, 0.0
      $region40: #{_lambda_.19} parent=35 // pred_fallthru
        _
      %v322 = vld [vmem:[%s284] sm:$0xf]
      %v323 = vld [vmem:[%s291] sm:$0xf]
      %v324 = vld [vmem:[%s298] sm:$0xf]
      %v325 = vld [vmem:[%s304] sm:$0x1]
      %vm326 = vcmask 64512
      %v328 = vsel %vm326, %v322, 0
      %v331 = vsel %vm326, %v323, 0
      %333 = vmatpush.bf16.xpose.msra.mxu0 0
      %334 = vmatpush.bf16.xpose.msra.mxu0 0
      %335 = vmatpush.bf16.xpose.msra.mxu0 0
      %336 = vmatpush.bf16.xpose.msra.mxu0 0
      %337 = vmatpush.bf16.xpose.msra.mxu0 0
      %338 = vmatpush.bf16.xpose.msra.mxu0 0
      %339 = vmatpush.bf16.xpose.msra.mxu0 0
      %340 = vmatpush.bf16.xpose.msra.mxu0 %v331
      %341 = vmatmul.bf16.gmra.mxu0 %v328
      %v342 = vpop.f32.mrf.mxu0
      %v343 = vadd.f32 0.0, %v342
      %v344 = vpop.f32.mrf.mxu0
      %345 = vdwg.mxu0
      %v346 = vmul.f32 %v343, 0.35355338
      %v348 = vperm.slane %v325, 0
      %v350 = vadd.f32 %v346, %v348
      %v351 = vld [vmem:[#allocation2] sm:$0xff]
      %v352 = vsel %vm326, %v350, -inf
      %353 = vmax.xlane.f32.xlu0 %v352
      %v354 = vpop.xlane.xlu0 %353
      %v355 = vmax.f32 %v351, %v354
      %v356 = vsub.f32 %v351, %v355
      %v357 = vmul.f32 %v356, 1.442695
      %v358 = vpow.pop %v357
      %360 = vset.pattern.permute.xlu0 0
      %361 = vperm.xlu0 %360, %v355
      %v362 = vpop.permute.xlu0 %361
      %v364 = vsub.f32 %v350, %v362
      %v365 = vmul.f32 %v364, 1.442695
      %v366 = vpow.pop %v365
      %v367 = vld [vmem:[#allocation3] sm:$0xff]
      %v368 = vmul.f32 %v358, %v367
      %v369 = vsel %vm326, %v366, 0.0
      %370 = vadd.xlane.f32.xlu0 %v369
      %v371 = vpop.xlane.xlu0 %370
      %v372 = vadd.f32 %v368, %v371
      %vm373 = vcmask 7168
      %374 = vst.msk [vmem:[#allocation3] sm:$0xff] %vm373, %v372
      %v375 = vpack.c.bf16 %v366, %v366
      %v377 = vsel %vm326, %v375, 0
      %vm379 = vcmask 1043456
      %v381 = vsel %vm379, %v324, 0
      %383 = vmatpush.bf16.msra.mxu0 0
      %384 = vmatpush.bf16.msra.mxu0 0
      %385 = vmatpush.bf16.msra.mxu0 0
      %386 = vmatpush.bf16.msra.mxu0 0
      %387 = vmatpush.bf16.msra.mxu0 0
      %388 = vmatpush.bf16.msra.mxu0 0
      %389 = vmatpush.bf16.msra.mxu0 0
      %390 = vmatpush.bf16.msra.mxu0 %v381
      %391 = vmatmul.bf16.gmra.mxu0 %v377
      %v392 = vpop.f32.mrf.mxu0
      %v393 = vadd.f32 0.0, %v392
      %v394 = vpop.f32.mrf.mxu0
      %395 = vdwg.mxu0
      %v396 = vld [vmem:[#allocation4] sm:$0xff]
      %398 = vset.pattern.permute.xlu0 0
      %399 = vperm.xlu0 %398, %v358
      %v400 = vpop.permute.xlu0 %399
      %v402 = vmul.f32 %v400, %v396
      %v403 = vadd.f32 %v402, %v393
      %404 = vst.msk [vmem:[#allocation4] sm:$0xff] %vm326, %v403
      %405 = vst.msk [vmem:[#allocation2] sm:$0xff] %vm373, %v355
      %v407 = vunpack.c.l.b16 %v322
      %v408 = vpack.c.b16 %v407, %v407
      %409 = vrot.lane.b32.xlu0 %v408, 120
      %v410 = vpop.permute.xlu0 %409
      %v412 = vunpack.c.l.b16 %v323
      %v413 = vpack.c.b16 %v412, %v412
      %414 = vrot.lane.b32.xlu0 %v413, 120
      %v415 = vpop.permute.xlu0 %414
      %v417 = vsel %vm326, %v410, 0
      %v420 = vsel %vm326, %v415, 0
      %422 = vmatpush.bf16.xpose.msra.mxu0 0
      %423 = vmatpush.bf16.xpose.msra.mxu0 0
      %424 = vmatpush.bf16.xpose.msra.mxu0 0
      %425 = vmatpush.bf16.xpose.msra.mxu0 0
      %426 = vmatpush.bf16.xpose.msra.mxu0 0
      %427 = vmatpush.bf16.xpose.msra.mxu0 0
      %428 = vmatpush.bf16.xpose.msra.mxu0 0
      %429 = vmatpush.bf16.xpose.msra.mxu0 %v420
      %430 = vmatmul.bf16.gmra.mxu0 %v417
      %v431 = vpop.f32.mrf.mxu0
      %v432 = vadd.f32 0.0, %v431
      %v433 = vpop.f32.mrf.mxu0
      %434 = vdwg.mxu0
      %v435 = vmul.f32 %v432, 0.35355338
      %v436 = vadd.f32 %v435, %v348
      %v437 = vld [vmem:[#allocation2] sm:$0xff]
      %v438 = vsel %vm326, %v436, -inf
      %439 = vmax.xlane.f32.xlu0 %v438
      %v440 = vpop.xlane.xlu0 %439
      %v441 = vmax.f32 %v437, %v440
      %v442 = vsub.f32 %v437, %v441
      %v443 = vmul.f32 %v442, 1.442695
      %v444 = vpow.pop %v443
      %446 = vset.pattern.permute.xlu0 1
      %447 = vperm.xlu0 %446, %v441
      %v448 = vpop.permute.xlu0 %447
      %v450 = vsub.f32 %v436, %v448
      %v451 = vmul.f32 %v450, 1.442695
      %v452 = vpow.pop %v451
      %v453 = vld [vmem:[#allocation3] sm:$0xff]
      %v454 = vmul.f32 %v444, %v453
      %v455 = vsel %vm326, %v452, 0.0
      %456 = vadd.xlane.f32.xlu0 %v455
      %v457 = vpop.xlane.xlu0 %456
      %v458 = vadd.f32 %v454, %v457
      %vm459 = vcmask 15368
      %460 = vst.msk [vmem:[#allocation3] sm:$0xff] %vm459, %v458
      %v461 = vpack.c.bf16 %v452, %v452
      %v463 = vunpack.c.l.b16 %v324
      %v464 = vpack.c.b16 %v463, %v463
      %465 = vrot.lane.b32.xlu0 %v464, 120
      %v466 = vpop.permute.xlu0 %465
      %v468 = vsel %vm326, %v461, 0
      %v471 = vsel %vm379, %v466, 0
      %473 = vmatpush.bf16.msra.mxu0 0
      %474 = vmatpush.bf16.msra.mxu0 0
      %475 = vmatpush.bf16.msra.mxu0 0
      %476 = vmatpush.bf16.msra.mxu0 0
      %477 = vmatpush.bf16.msra.mxu0 0
      %478 = vmatpush.bf16.msra.mxu0 0
      %479 = vmatpush.bf16.msra.mxu0 0
      %480 = vmatpush.bf16.msra.mxu0 %v471
      %481 = vmatmul.bf16.gmra.mxu0 %v468
      %v482 = vpop.f32.mrf.mxu0
      %v483 = vadd.f32 0.0, %v482
      %v484 = vpop.f32.mrf.mxu0
      %485 = vdwg.mxu0
      %v486 = vld [vmem:[#allocation4] sm:$0xff]
      %488 = vset.pattern.permute.xlu0 1
      %489 = vperm.xlu0 %488, %v444
      %v490 = vpop.permute.xlu0 %489
      %v492 = vmul.f32 %v490, %v486
      %494 = vrot.lane.b32.xlu0 %v483, 8
      %v495 = vpop.permute.xlu0 %494
      %v497 = vadd.f32 %v492, %v495
      %vm498 = vcmask 130112
      %499 = vst.msk [vmem:[#allocation4] sm:$0xff] %vm498, %v497
      %500 = vst.msk [vmem:[#allocation2] sm:$0xff] %vm459, %v441
      %501 = vrot.lane.b32.xlu0 %v408, 112
      %v502 = vpop.permute.xlu0 %501
      %503 = vrot.lane.b32.xlu0 %v413, 112
      %v504 = vpop.permute.xlu0 %503
      %v506 = vsel %vm326, %v502, 0
      %v509 = vsel %vm326, %v504, 0
      %511 = vmatpush.bf16.xpose.msra.mxu0 0
      %512 = vmatpush.bf16.xpose.msra.mxu0 0
      %513 = vmatpush.bf16.xpose.msra.mxu0 0
      %514 = vmatpush.bf16.xpose.msra.mxu0 0
      %515 = vmatpush.bf16.xpose.msra.mxu0 0
      %516 = vmatpush.bf16.xpose.msra.mxu0 0
      %517 = vmatpush.bf16.xpose.msra.mxu0 0
      %518 = vmatpush.bf16.xpose.msra.mxu0 %v509
      %519 = vmatmul.bf16.gmra.mxu0 %v506
      %v520 = vpop.f32.mrf.mxu0
      %v521 = vadd.f32 0.0, %v520
      %v522 = vpop.f32.mrf.mxu0
      %523 = vdwg.mxu0
      %v524 = vmul.f32 %v521, 0.35355338
      %v525 = vadd.f32 %v524, %v348
      %v526 = vld [vmem:[#allocation2] sm:$0xff]
      %v527 = vsel %vm326, %v525, -inf
      %528 = vmax.xlane.f32.xlu0 %v527
      %v529 = vpop.xlane.xlu0 %528
      %v530 = vmax.f32 %v526, %v529
      %v531 = vsub.f32 %v526, %v530
      %v532 = vmul.f32 %v531, 1.442695
      %v533 = vpow.pop %v532
      %535 = vset.pattern.permute.xlu0 2
      %536 = vperm.xlu0 %535, %v530
      %v537 = vpop.permute.xlu0 %536
      %v539 = vsub.f32 %v525, %v537
      %v540 = vmul.f32 %v539, 1.442695
      %v541 = vpow.pop %v540
      %v542 = vld [vmem:[#allocation3] sm:$0xff]
      %v543 = vmul.f32 %v533, %v542
      %v544 = vsel %vm326, %v541, 0.0
      %545 = vadd.xlane.f32.xlu0 %v544
      %v546 = vpop.xlane.xlu0 %545
      %v547 = vadd.f32 %v543, %v546
      %vm548 = vcmask 23568
      %549 = vst.msk [vmem:[#allocation3] sm:$0xff] %vm548, %v547
      %v550 = vpack.c.bf16 %v541, %v541
      %551 = vrot.lane.b32.xlu0 %v464, 112
      %v552 = vpop.permute.xlu0 %551
      %v554 = vsel %vm326, %v550, 0
      %v557 = vsel %vm379, %v552, 0
      %559 = vmatpush.bf16.msra.mxu0 0
      %560 = vmatpush.bf16.msra.mxu0 0
      %561 = vmatpush.bf16.msra.mxu0 0
      %562 = vmatpush.bf16.msra.mxu0 0
      %563 = vmatpush.bf16.msra.mxu0 0
      %564 = vmatpush.bf16.msra.mxu0 0
      %565 = vmatpush.bf16.msra.mxu0 0
      %566 = vmatpush.bf16.msra.mxu0 %v557
      %567 = vmatmul.bf16.gmra.mxu0 %v554
      %v568 = vpop.f32.mrf.mxu0
      %v569 = vadd.f32 0.0, %v568
      %v570 = vpop.f32.mrf.mxu0
      %571 = vdwg.mxu0
      %v572 = vld [vmem:[#allocation4] sm:$0xff]
      %574 = vset.pattern.permute.xlu0 2
      %575 = vperm.xlu0 %574, %v533
      %v576 = vpop.permute.xlu0 %575
      %v578 = vmul.f32 %v576, %v572
      %580 = vrot.lane.b32.xlu0 %v569, 16
      %v581 = vpop.permute.xlu0 %580
      %v583 = vadd.f32 %v578, %v581
      %vm584 = vcmask 195712
      %585 = vst.msk [vmem:[#allocation4] sm:$0xff] %vm584, %v583
      %586 = vst.msk [vmem:[#allocation2] sm:$0xff] %vm548, %v530
      %587 = vrot.lane.b32.xlu0 %v408, 104
      %v588 = vpop.permute.xlu0 %587
      %589 = vrot.lane.b32.xlu0 %v413, 104
      %v590 = vpop.permute.xlu0 %589
      %v592 = vsel %vm326, %v588, 0
      %v595 = vsel %vm326, %v590, 0
      %597 = vmatpush.bf16.xpose.msra.mxu0 0
      %598 = vmatpush.bf16.xpose.msra.mxu0 0
      %599 = vmatpush.bf16.xpose.msra.mxu0 0
      %600 = vmatpush.bf16.xpose.msra.mxu0 0
      %601 = vmatpush.bf16.xpose.msra.mxu0 0
      %602 = vmatpush.bf16.xpose.msra.mxu0 0
      %603 = vmatpush.bf16.xpose.msra.mxu0 0
      %604 = vmatpush.bf16.xpose.msra.mxu0 %v595
      %605 = vmatmul.bf16.gmra.mxu0 %v592
      %v606 = vpop.f32.mrf.mxu0
      %v607 = vadd.f32 0.0, %v606
      %v608 = vpop.f32.mrf.mxu0
      %609 = vdwg.mxu0
      %v610 = vmul.f32 %v607, 0.35355338
      %v611 = vadd.f32 %v610, %v348
      %v612 = vld [vmem:[#allocation2] sm:$0xff]
      %v613 = vsel %vm326, %v611, -inf
      %614 = vmax.xlane.f32.xlu0 %v613
      %v615 = vpop.xlane.xlu0 %614
      %v616 = vmax.f32 %v612, %v615
      %v617 = vsub.f32 %v612, %v616
      %v618 = vmul.f32 %v617, 1.442695
      %v619 = vpow.pop %v618
      %621 = vset.pattern.permute.xlu0 3
      %622 = vperm.xlu0 %621, %v616
      %v623 = vpop.permute.xlu0 %622
      %v625 = vsub.f32 %v611, %v623
      %v626 = vmul.f32 %v625, 1.442695
      %v627 = vpow.pop %v626
      %v628 = vld [vmem:[#allocation3] sm:$0xff]
      %v629 = vmul.f32 %v619, %v628
      %v630 = vsel %vm326, %v627, 0.0
      %631 = vadd.xlane.f32.xlu0 %v630
      %v632 = vpop.xlane.xlu0 %631
      %v633 = vadd.f32 %v629, %v632
      %vm634 = vcmask 31768
      %635 = vst.msk [vmem:[#allocation3] sm:$0xff] %vm634, %v633
      %v636 = vpack.c.bf16 %v627, %v627
      %637 = vrot.lane.b32.xlu0 %v464, 104
      %v638 = vpop.permute.xlu0 %637
      %v640 = vsel %vm326, %v636, 0
      %v643 = vsel %vm379, %v638, 0
      %645 = vmatpush.bf16.msra.mxu0 0
      %646 = vmatpush.bf16.msra.mxu0 0
      %647 = vmatpush.bf16.msra.mxu0 0
      %648 = vmatpush.bf16.msra.mxu0 0
      %649 = vmatpush.bf16.msra.mxu0 0
      %650 = vmatpush.bf16.msra.mxu0 0
      %651 = vmatpush.bf16.msra.mxu0 0
      %652 = vmatpush.bf16.msra.mxu0 %v643
      %653 = vmatmul.bf16.gmra.mxu0 %v640
      %v654 = vpop.f32.mrf.mxu0
      %v655 = vadd.f32 0.0, %v654
      %v656 = vpop.f32.mrf.mxu0
      %657 = vdwg.mxu0
      %v658 = vld [vmem:[#allocation4] sm:$0xff]
      %660 = vset.pattern.permute.xlu0 3
      %661 = vperm.xlu0 %660, %v619
      %v662 = vpop.permute.xlu0 %661
      %v664 = vmul.f32 %v662, %v658
      %666 = vrot.lane.b32.xlu0 %v655, 24
      %v667 = vpop.permute.xlu0 %666
      %v669 = vadd.f32 %v664, %v667
      %vm670 = vcmask 261312
      %671 = vst.msk [vmem:[#allocation4] sm:$0xff] %vm670, %v669
      %672 = vst.msk [vmem:[#allocation2] sm:$0xff] %vm634, %v616
      // Predicated region
      $region41: #{_lambda_.19} parent=35 // pred_check
        %p673 = pneg %p313
      $region42: #{_lambda_.19} parent=35 // pred_check_branch
        %675 = sbr.rel (%p673) target = $region44
      $region43: #{_lambda_.19} parent=35 // pred_region
        %v676 = vld [vmem:[#allocation4] sm:$0xff]
        %v677 = vld [vmem:[#allocation3] sm:$0xff]
        %679 = vset.pattern.permute.xlu0 0
        %680 = vperm.xlu0 %679, %v677
        %v681 = vpop.permute.xlu0 %680
        %v683 = vrcp.pop %v681
        %v684 = vmul.f32 %v681, %v683
        %v685 = vsub.f32 1.0, %v684
        %v686 = vmul.f32 %v683, %v685
        %v687 = vadd.f32 %v683, %v686
        %vm688 = vweird.f32 %v681
        %vm689 = vweird.f32 %v683
        %vm690 = vmor %vm688, %vm689
        %v691 = vsel %vm690, %v683, %v687
        %v692 = vand.u32 2147483647, %v681
        %vm693 = vcmp.eq.f32.partialorder %v692, 8.507059e+37
        %v694 = vand.u32 %v681, 2147483648
        %v695 = vor.u32 1.1754944e-38, %v694
        %v696 = vsel %vm693, %v695, %v691
        %v697 = vmul.f32 %v676, %v696
        %698 = vset.pattern.permute.xlu0 1
        %699 = vperm.xlu0 %698, %v677
        %v700 = vpop.permute.xlu0 %699
        %v702 = vrcp.pop %v700
        %v703 = vmul.f32 %v700, %v702
        %v704 = vsub.f32 1.0, %v703
        %v705 = vmul.f32 %v702, %v704
        %v706 = vadd.f32 %v702, %v705
        %vm707 = vweird.f32 %v700
        %vm708 = vweird.f32 %v702
        %vm709 = vmor %vm707, %vm708
        %v710 = vsel %vm709, %v702, %v706
        %v711 = vand.u32 2147483647, %v700
        %vm712 = vcmp.eq.f32.partialorder %v711, 8.507059e+37
        %v713 = vand.u32 %v700, 2147483648
        %v714 = vor.u32 1.1754944e-38, %v713
        %v715 = vsel %vm712, %v714, %v710
        %v716 = vmul.f32 %v676, %v715
        %717 = vset.pattern.permute.xlu0 2
        %718 = vperm.xlu0 %717, %v677
        %v719 = vpop.permute.xlu0 %718
        %v721 = vrcp.pop %v719
        %v722 = vmul.f32 %v719, %v721
        %v723 = vsub.f32 1.0, %v722
        %v724 = vmul.f32 %v721, %v723
        %v725 = vadd.f32 %v721, %v724
        %vm726 = vweird.f32 %v719
        %vm727 = vweird.f32 %v721
        %vm728 = vmor %vm726, %vm727
        %v729 = vsel %vm728, %v721, %v725
        %v730 = vand.u32 2147483647, %v719
        %vm731 = vcmp.eq.f32.partialorder %v730, 8.507059e+37
        %v732 = vand.u32 %v719, 2147483648
        %v733 = vor.u32 1.1754944e-38, %v732
        %v734 = vsel %vm731, %v733, %v729
        %v735 = vmul.f32 %v676, %v734
        %736 = vset.pattern.permute.xlu0 3
        %737 = vperm.xlu0 %736, %v677
        %v738 = vpop.permute.xlu0 %737
        %v740 = vrcp.pop %v738
        %v741 = vmul.f32 %v738, %v740
        %v742 = vsub.f32 1.0, %v741
        %v743 = vmul.f32 %v740, %v742
        %v744 = vadd.f32 %v740, %v743
        %vm745 = vweird.f32 %v738
        %vm746 = vweird.f32 %v740
        %vm747 = vmor %vm745, %vm746
        %v748 = vsel %vm747, %v740, %v744
        %v749 = vand.u32 2147483647, %v738
        %vm750 = vcmp.eq.f32.partialorder %v749, 8.507059e+37
        %v751 = vand.u32 %v738, 2147483648
        %v752 = vor.u32 1.1754944e-38, %v751
        %v753 = vsel %vm750, %v752, %v748
        %v754 = vmul.f32 %v676, %v753
        %v755 = vsel %vm326, %v697, %v716
        %vm756 = vcmask 130048
        %v757 = vsel %vm756, %v755, %v735
        %vm758 = vcmask 195584
        %v759 = vsel %vm758, %v757, %v754
        %vm760 = vcmask 261120
        %761 = vst.msk [vmem:[%s311] sm:$0xff] %vm760, %v759
      $region44: #{_lambda_.19} parent=35 // pred_fallthru
        _
      %p762 = scmp.lt.s32.totalorder %s20, 1
      %s763 = scalar_select %p762, %s20, 1
      %p764 = scmp.lt.s32.totalorder %s21, 0
      %s765 = scalar_select %p764, %s21, 0
      %s766 = sadd.s32 %s765, %s763
      %s767 = smul.addr %s766, 8
      %s768 = scalar_lea.vmem %s4, %s767
      // Predicated region
      $region45: #{_lambda_.19} parent=35 // pred_check
        %p769 = pneg %p166
      $region46: #{_lambda_.19} parent=35 // pred_check_branch
        %771 = sbr.rel (%p769) target = $region48
      $region47: #{_lambda_.19} parent=35 // pred_region
        _
      $region48: #{_lambda_.19} parent=35 // pred_fallthru
        _
    $region36: #{_lambda_.19} parent=5 // pred_fallthru
      _
    %p772 = scmp.le.s32.totalorder 2, %s10
    // Predicated region
    $region49: #{_lambda_.19} parent=5 // pred_check
      %p773 = pneg %p772
    $region50: #{_lambda_.19} parent=5 // pred_check_branch
      %775 = sbr.rel (%p773) target = $region52
    $region51: #{_lambda_.19} parent=5 // pred_region
      %s776 = ssub.s32 %s10, 2
      // Predicated region
      $region53: #{_lambda_.19} parent=51 // pred_check
        %p777 = pneg %p172
      $region54: #{_lambda_.19} parent=51 // pred_check_branch
        %779 = sbr.rel (%p777) target = $region56
      $region55: #{_lambda_.19} parent=51 // pred_region
        %p780 = scmp.lt.s32.totalorder %s23, 1
        %s781 = scalar_select %p780, %s23, 1
        %p782 = scmp.lt.s32.totalorder %s24, 0
        %s783 = scalar_select %p782, %s24, 0
        %s784 = sadd.s32 %s783, %s781
        %s785 = smul.addr %s784, 8
        %s786 = scalar_lea.vmem %s4, %s785
      $region56: #{_lambda_.19} parent=51 // pred_fallthru
        _
    $region52: #{_lambda_.19} parent=5 // pred_fallthru
      _
  $region6: #{_lambda_.19} parent=0 // loop_footer
    %s14 = sadd.s32 1, %s10
  $region7: #{_lambda_.19} parent=0 // loop_footer_branch
    %9 = sbr.rel target = $region3
  $region8: #{_lambda_.19} parent=0 // loop_exit
    _

// kernel: _lambda_.22
$region0: #{_lambda_.22}
  #allocation0 [shape = 'u32[]', space=smem, size = 0x4, offset = 0x4, fixed_abs, tag = 'smem constant byte address 0x4 - core index']
  #allocation1 [shape = 'u32[72,128]{1,0:T(1,128)}', space=vmem, size = 0x9000, scoped, tag = 'internal scratch']
  %s0 = inlined_call_operand.vmem [shape: bf16[16,32], index: 0, kind: input, shape index: {}]
  %s1 = inlined_call_operand.vmem [shape: bf16[32,128], index: 1, kind: input, shape index: {}]
  %s2 = inlined_call_operand.vmem [shape: f32[1,128], index: 2, kind: input, shape index: {}]
  %s3 = inlined_call_operand.vmem [shape: f32[16,128], index: 3, kind: output, shape index: {}]
  %s4 = sld [smem:[#allocation0]]
  $region22: #{_lambda_.22} parent=0
    _
  %s6 = ssub.s32 1, %s4
  %s7 = scalar_select 0, %s6, %s4
  // Predicated region
  $region2: #{_lambda_.22} parent=0 // pred_check
    _
  $region3: #{_lambda_.22} parent=0 // pred_check_branch
    %9 = sbr.rel (0) target = $region5
  $region4: #{_lambda_.22} parent=0 // pred_region
    _
  $region5: #{_lambda_.22} parent=0 // pred_fallthru
    _
  // Predicated region
  $region6: #{_lambda_.22} parent=0 // pred_check
    _
  $region7: #{_lambda_.22} parent=0 // pred_check_branch
    %11 = sbr.rel (0) target = $region9
  $region8: #{_lambda_.22} parent=0 // pred_region
    _
  $region9: #{_lambda_.22} parent=0 // pred_fallthru
    _
  // Predicated region
  $region10: #{_lambda_.22} parent=0 // pred_check
    _
  $region11: #{_lambda_.22} parent=0 // pred_check_branch
    %13 = sbr.rel (0) target = $region13
  $region12: #{_lambda_.22} parent=0 // pred_region
    _
  $region13: #{_lambda_.22} parent=0 // pred_fallthru
    _
  %v15 = vld [vmem:[%s0] sm:$0xf]
  %v16 = vld [vmem:[%s0 + $0x4] sm:$0xf]
  %v17 = vld [vmem:[%s1] sm:$0xf]
  %v18 = vld [vmem:[%s1 + $0x4] sm:$0xf]
  %v19 = vld [vmem:[%s1 + $0x8] sm:$0xf]
  %v20 = vld [vmem:[%s1 + $0xc] sm:$0xf]
  %v21 = vld [vmem:[%s2] sm:$0x1]
  %v23 = vperm.slane %v21, 0
  %v27 = vunpack.c.l.b16 %v15
  %v28 = vunpack.c.l.b16 %v16
  %v29 = vpack.c.b16 %v28, %v27
  %v34 = vunpack.c.l.b16 %v17
  %v35 = vunpack.c.l.b16 %v18
  %v36 = vunpack.c.l.b16 %v19
  %v37 = vunpack.c.l.b16 %v20
  %v38 = vpack.c.b16 %v35, %v34
  %v39 = vpack.c.b16 %v37, %v36
  %vm42 = vcmask 261120
  %v44 = vsel %vm42, %v29, 0
  %46 = vmatpush.bf16.msra.mxu0 0
  %47 = vmatpush.bf16.msra.mxu0 0
  %48 = vmatpush.bf16.msra.mxu0 0
  %49 = vmatpush.bf16.msra.mxu0 0
  %50 = vmatpush.bf16.msra.mxu0 0
  %51 = vmatpush.bf16.msra.mxu0 0
  %52 = vmatpush.bf16.msra.mxu0 %v39
  %53 = vmatpush.bf16.msra.mxu0 %v38
  %54 = vmatmul.bf16.gmra.mxu0 %v44
  %v55 = vpop.f32.mrf.mxu0
  %v56 = vadd.f32 %v23, %v55
  %v57 = vpop.f32.mrf.mxu0
  %v58 = vadd.f32 %v23, %v57
  %59 = vdwg.mxu0
  %v60 = vmul.f32 %v56, 0.5
  %v61 = vmul.f32 %v58, 0.5
  %v62 = vrcp.pop 1.4142135
  %v63 = vmul.f32 1.4142135, %v62
  %v64 = vsub.f32 1.0, %v63
  %v65 = vmul.f32 %v62, %v64
  %v66 = vadd.f32 %v62, %v65
  %vm67 = vweird.f32 %v62
  %v68 = vsel %vm67, %v62, %v66
  %v69 = vmul.f32 %v56, %v68
  %v70 = vmul.f32 %v58, %v68
  %v71 = vmul.f32 %v69, %v69
  %v72 = vmin.f32 16.0, %v71
  %v73 = vmul.f32 %v72, 2.1237322e-06
  %v74 = vadd.f32 %v73, 0.00028619796
  %v75 = vmul.f32 %v72, %v74
  %v76 = vadd.f32 %v75, 0.0036580483
  %v77 = vmul.f32 %v72, %v76
  %v78 = vadd.f32 %v77, 0.05243302
  %v79 = vmul.f32 %v72, %v78
  %v80 = vadd.f32 %v79, 0.18741608
  %v81 = vmul.f32 %v72, %v80
  %v82 = vadd.f32 %v81, 1.1283791
  %v83 = vmul.f32 %v69, %v82
  %v84 = vmul.f32 %v72, 3.8918573e-05
  %v85 = vadd.f32 %v84, 0.001143296
  %v86 = vmul.f32 %v72, %v85
  %v87 = vadd.f32 %v86, 0.014752088
  %v88 = vmul.f32 %v72, %v87
  %v89 = vadd.f32 %v88, 0.112945676
  %v90 = vmul.f32 %v72, %v89
  %v91 = vadd.f32 %v90, 0.4994258
  %v92 = vmul.f32 %v72, %v91
  %v93 = vadd.f32 %v92, 1.0
  %v94 = vrcp.pop %v93
  %v95 = vmul.f32 %v93, %v94
  %v96 = vsub.f32 1.0, %v95
  %v97 = vmul.f32 %v94, %v96
  %v98 = vadd.f32 %v94, %v97
  %vm99 = vweird.f32 %v93
  %vm100 = vweird.f32 %v94
  %vm101 = vmor %vm99, %vm100
  %v102 = vsel %vm101, %v94, %v98
  %v103 = vand.u32 2147483647, %v93
  %vm104 = vcmp.eq.f32.partialorder %v103, 8.507059e+37
  %v105 = vand.u32 %v93, 2147483648
  %v106 = vor.u32 1.1754944e-38, %v105
  %v107 = vsel %vm104, %v106, %v102
  %v108 = vmul.f32 %v83, %v107
  %v109 = vmin.f32 %v108, 1.0
  %v110 = vmax.f32 %v109, -1.0
  %v111 = vmul.f32 %v70, %v70
  %v112 = vmin.f32 16.0, %v111
  %v113 = vmul.f32 %v112, 2.1237322e-06
  %v114 = vadd.f32 %v113, 0.00028619796
  %v115 = vmul.f32 %v112, %v114
  %v116 = vadd.f32 %v115, 0.0036580483
  %v117 = vmul.f32 %v112, %v116
  %v118 = vadd.f32 %v117, 0.05243302
  %v119 = vmul.f32 %v112, %v118
  %v120 = vadd.f32 %v119, 0.18741608
  %v121 = vmul.f32 %v112, %v120
  %v122 = vadd.f32 %v121, 1.1283791
  %v123 = vmul.f32 %v70, %v122
  %v124 = vmul.f32 %v112, 3.8918573e-05
  %v125 = vadd.f32 %v124, 0.001143296
  %v126 = vmul.f32 %v112, %v125
  %v127 = vadd.f32 %v126, 0.014752088
  %v128 = vmul.f32 %v112, %v127
  %v129 = vadd.f32 %v128, 0.112945676
  %v130 = vmul.f32 %v112, %v129
  %v131 = vadd.f32 %v130, 0.4994258
  %v132 = vmul.f32 %v112, %v131
  %v133 = vadd.f32 %v132, 1.0
  %v134 = vrcp.pop %v133
  %v135 = vmul.f32 %v133, %v134
  %v136 = vsub.f32 1.0, %v135
  %v137 = vmul.f32 %v134, %v136
  %v138 = vadd.f32 %v134, %v137
  %vm139 = vweird.f32 %v133
  %vm140 = vweird.f32 %v134
  %vm141 = vmor %vm139, %vm140
  %v142 = vsel %vm141, %v134, %v138
  %v143 = vand.u32 2147483647, %v133
  %vm144 = vcmp.eq.f32.partialorder %v143, 8.507059e+37
  %v145 = vand.u32 %v133, 2147483648
  %v146 = vor.u32 1.1754944e-38, %v145
  %v147 = vsel %vm144, %v146, %v142
  %v148 = vmul.f32 %v123, %v147
  %v149 = vmin.f32 %v148, 1.0
  %v150 = vmax.f32 %v149, -1.0
  %v151 = vadd.f32 %v110, 1.0
  %v152 = vadd.f32 %v150, 1.0
  %v153 = vmul.f32 %v60, %v151
  %v154 = vmul.f32 %v61, %v152
  %155 = vst [vmem:[%s3] sm:$0xff] %v153
  %156 = vst [vmem:[%s3 + $0x8] sm:$0xff] %v154
  // Predicated region
  $region14: #{_lambda_.22} parent=0 // pred_check
    _
  $region15: #{_lambda_.22} parent=0 // pred_check_branch
    %158 = sbr.rel (0) target = $region17
  $region16: #{_lambda_.22} parent=0 // pred_region
    _
  $region17: #{_lambda_.22} parent=0 // pred_fallthru
    _
  // Predicated region
  $region18: #{_lambda_.22} parent=0 // pred_check
    _
  $region19: #{_lambda_.22} parent=0 // pred_check_branch
    %160 = sbr.rel (0) target = $region21
  $region20: #{_lambda_.22} parent=0 // pred_region
    _
  $region21: #{_lambda_.22} parent=0 // pred_fallthru
    _

// kernel: _lambda_.23
$region0: #{_lambda_.23}
  #allocation0 [shape = 'u32[]', space=smem, size = 0x4, offset = 0x4, fixed_abs, tag = 'smem constant byte address 0x4 - core index']
  #allocation1 [shape = 'u32[72,128]{1,0:T(1,128)}', space=vmem, size = 0x9000, scoped, tag = 'internal scratch']
  %s0 = inlined_call_operand.vmem [shape: bf16[16,64], index: 0, kind: input, shape index: {}]
  %s1 = inlined_call_operand.vmem [shape: bf16[64,128], index: 1, kind: input, shape index: {}]
  %s2 = inlined_call_operand.vmem [shape: f32[1,128], index: 2, kind: input, shape index: {}]
  %s3 = inlined_call_operand.vmem [shape: f32[16,128], index: 3, kind: output, shape index: {}]
  %s4 = sld [smem:[#allocation0]]
  $region22: #{_lambda_.23} parent=0
    _
  %s6 = ssub.s32 1, %s4
  %s7 = scalar_select 0, %s6, %s4
  // Predicated region
  $region2: #{_lambda_.23} parent=0 // pred_check
    _
  $region3: #{_lambda_.23} parent=0 // pred_check_branch
    %9 = sbr.rel (0) target = $region5
  $region4: #{_lambda_.23} parent=0 // pred_region
    _
  $region5: #{_lambda_.23} parent=0 // pred_fallthru
    _
  // Predicated region
  $region6: #{_lambda_.23} parent=0 // pred_check
    _
  $region7: #{_lambda_.23} parent=0 // pred_check_branch
    %11 = sbr.rel (0) target = $region9
  $region8: #{_lambda_.23} parent=0 // pred_region
    _
  $region9: #{_lambda_.23} parent=0 // pred_fallthru
    _
  // Predicated region
  $region10: #{_lambda_.23} parent=0 // pred_check
    _
  $region11: #{_lambda_.23} parent=0 // pred_check_branch
    %13 = sbr.rel (0) target = $region13
  $region12: #{_lambda_.23} parent=0 // pred_region
    _
  $region13: #{_lambda_.23} parent=0 // pred_fallthru
    _
  %v15 = vld [vmem:[%s0] sm:$0xf]
  %v16 = vld [vmem:[%s0 + $0x4] sm:$0xf]
  %v17 = vld [vmem:[%s1] sm:$0xf]
  %v18 = vld [vmem:[%s1 + $0x4] sm:$0xf]
  %v19 = vld [vmem:[%s1 + $0x8] sm:$0xf]
  %v20 = vld [vmem:[%s1 + $0xc] sm:$0xf]
  %v21 = vld [vmem:[%s1 + $0x10] sm:$0xf]
  %v22 = vld [vmem:[%s1 + $0x14] sm:$0xf]
  %v23 = vld [vmem:[%s1 + $0x18] sm:$0xf]
  %v24 = vld [vmem:[%s1 + $0x1c] sm:$0xf]
  %v25 = vld [vmem:[%s2] sm:$0x1]
  %v27 = vperm.slane %v25, 0
  %v31 = vunpack.c.l.b16 %v15
  %v32 = vunpack.c.l.b16 %v16
  %v33 = vpack.c.b16 %v32, %v31
  %v42 = vunpack.c.l.b16 %v17
  %v43 = vunpack.c.l.b16 %v18
  %v44 = vunpack.c.l.b16 %v19
  %v45 = vunpack.c.l.b16 %v20
  %v46 = vunpack.c.l.b16 %v21
  %v47 = vunpack.c.l.b16 %v22
  %v48 = vunpack.c.l.b16 %v23
  %v49 = vunpack.c.l.b16 %v24
  %v50 = vpack.c.b16 %v43, %v42
  %v51 = vpack.c.b16 %v45, %v44
  %v52 = vpack.c.b16 %v47, %v46
  %v53 = vpack.c.b16 %v49, %v48
  %vm58 = vcmask 523264
  %v60 = vsel %vm58, %v33, 0
  %62 = vmatpush.bf16.msra.mxu0 0
  %63 = vmatpush.bf16.msra.mxu0 0
  %64 = vmatpush.bf16.msra.mxu0 0
  %65 = vmatpush.bf16.msra.mxu0 0
  %66 = vmatpush.bf16.msra.mxu0 %v53
  %67 = vmatpush.bf16.msra.mxu0 %v52
  %68 = vmatpush.bf16.msra.mxu0 %v51
  %69 = vmatpush.bf16.msra.mxu0 %v50
  %70 = vmatmul.bf16.gmra.mxu0 %v60
  %v71 = vpop.f32.mrf.mxu0
  %v72 = vadd.f32 %v27, %v71
  %v73 = vpop.f32.mrf.mxu0
  %v74 = vadd.f32 %v27, %v73
  %75 = vdwg.mxu0
  %76 = vst [vmem:[%s3] sm:$0xff] %v72
  %77 = vst [vmem:[%s3 + $0x8] sm:$0xff] %v74
  // Predicated region
  $region14: #{_lambda_.23} parent=0 // pred_check
    _
  $region15: #{_lambda_.23} parent=0 // pred_check_branch
    %79 = sbr.rel (0) target = $region17
  $region16: #{_lambda_.23} parent=0 // pred_region
    _
  $region17: #{_lambda_.23} parent=0 // pred_fallthru
    _
  // Predicated region
  $region18: #{_lambda_.23} parent=0 // pred_check
    _
  $region19: #{_lambda_.23} parent=0 // pred_check_branch
    %81 = sbr.rel (0) target = $region21
  $region20: #{_lambda_.23} parent=0 // pred_region
    _
  $region21: #{_lambda_.23} parent=0 // pred_fallthru
    _

// kernel: _lambda_.32
$region0: #{_lambda_.32}
  #allocation0 [shape = 'u32[]', space=smem, size = 0x4, offset = 0x4, fixed_abs, tag = 'smem constant byte address 0x4 - core index']
  #allocation1 [shape = 'u32[72,128]{1,0:T(1,128)}', space=vmem, size = 0x9000, scoped, tag = 'internal scratch']
  %s0 = inlined_call_operand.vmem [shape: bf16[8,32], index: 0, kind: input, shape index: {}]
  %s1 = inlined_call_operand.vmem [shape: bf16[32,128], index: 1, kind: input, shape index: {}]
  %s2 = inlined_call_operand.vmem [shape: f32[1,128], index: 2, kind: input, shape index: {}]
  %s3 = inlined_call_operand.vmem [shape: f32[8,128], index: 3, kind: output, shape index: {}]
  %s4 = sld [smem:[#allocation0]]
  $region22: #{_lambda_.32} parent=0
    _
  %s6 = ssub.s32 1, %s4
  %s7 = scalar_select 0, %s6, %s4
  // Predicated region
  $region2: #{_lambda_.32} parent=0 // pred_check
    _
  $region3: #{_lambda_.32} parent=0 // pred_check_branch
    %9 = sbr.rel (0) target = $region5
  $region4: #{_lambda_.32} parent=0 // pred_region
    _
  $region5: #{_lambda_.32} parent=0 // pred_fallthru
    _
  // Predicated region
  $region6: #{_lambda_.32} parent=0 // pred_check
    _
  $region7: #{_lambda_.32} parent=0 // pred_check_branch
    %11 = sbr.rel (0) target = $region9
  $region8: #{_lambda_.32} parent=0 // pred_region
    _
  $region9: #{_lambda_.32} parent=0 // pred_fallthru
    _
  // Predicated region
  $region10: #{_lambda_.32} parent=0 // pred_check
    _
  $region11: #{_lambda_.32} parent=0 // pred_check_branch
    %13 = sbr.rel (0) target = $region13
  $region12: #{_lambda_.32} parent=0 // pred_region
    _
  $region13: #{_lambda_.32} parent=0 // pred_fallthru
    _
  %v15 = vld [vmem:[%s0] sm:$0xf]
  %v16 = vld [vmem:[%s1] sm:$0xf]
  %v17 = vld [vmem:[%s1 + $0x4] sm:$0xf]
  %v18 = vld [vmem:[%s1 + $0x8] sm:$0xf]
  %v19 = vld [vmem:[%s1 + $0xc] sm:$0xf]
  %v20 = vld [vmem:[%s2] sm:$0x1]
  %v22 = vperm.slane %v20, 0
  %v28 = vunpack.c.l.b16 %v16
  %v29 = vunpack.c.l.b16 %v17
  %v30 = vunpack.c.l.b16 %v18
  %v31 = vunpack.c.l.b16 %v19
  %v32 = vpack.c.b16 %v29, %v28
  %v33 = vpack.c.b16 %v31, %v30
  %vm36 = vcmask 261120
  %v38 = vsel %vm36, %v15, 0
  %40 = vmatpush.bf16.msra.mxu0 0
  %41 = vmatpush.bf16.msra.mxu0 0
  %42 = vmatpush.bf16.msra.mxu0 0
  %43 = vmatpush.bf16.msra.mxu0 0
  %44 = vmatpush.bf16.msra.mxu0 0
  %45 = vmatpush.bf16.msra.mxu0 0
  %46 = vmatpush.bf16.msra.mxu0 %v33
  %47 = vmatpush.bf16.msra.mxu0 %v32
  %48 = vmatmul.bf16.gmra.mxu0 %v38
  %v49 = vpop.f32.mrf.mxu0
  %v50 = vadd.f32 %v22, %v49
  %v51 = vpop.f32.mrf.mxu0
  %52 = vdwg.mxu0
  %v53 = vtanh.pop %v50
  %54 = vst [vmem:[%s3] sm:$0xff] %v53
  // Predicated region
  $region14: #{_lambda_.32} parent=0 // pred_check
    _
  $region15: #{_lambda_.32} parent=0 // pred_check_branch
    %56 = sbr.rel (0) target = $region17
  $region16: #{_lambda_.32} parent=0 // pred_region
    _
  $region17: #{_lambda_.32} parent=0 // pred_fallthru
    _
  // Predicated region
  $region18: #{_lambda_.32} parent=0 // pred_check
    _
  $region19: #{_lambda_.32} parent=0 // pred_check_branch
    %58 = sbr.rel (0) target = $region21
  $region20: #{_lambda_.32} parent=0 // pred_region
    _
  $region21: #{_lambda_.32} parent=0 // pred_fallthru
    _

// kernel: _lambda_.33
$region0: #{_lambda_.33}
  #allocation0 [shape = 'u32[]', space=smem, size = 0x4, offset = 0x4, fixed_abs, tag = 'smem constant byte address 0x4 - core index']
  #allocation1 [shape = 'u32[72,128]{1,0:T(1,128)}', space=vmem, size = 0x9000, scoped, tag = 'internal scratch']
  %s0 = inlined_call_operand.vmem [shape: bf16[8,32], index: 0, kind: input, shape index: {}]
  %s1 = inlined_call_operand.vmem [shape: bf16[32,128], index: 1, kind: input, shape index: {}]
  %s2 = inlined_call_operand.vmem [shape: f32[1,128], index: 2, kind: input, shape index: {}]
  %s3 = inlined_call_operand.vmem [shape: f32[8,128], index: 3, kind: output, shape index: {}]
  %s4 = sld [smem:[#allocation0]]
  $region22: #{_lambda_.33} parent=0
    _
  %s6 = ssub.s32 1, %s4
  %s7 = scalar_select 0, %s6, %s4
  // Predicated region
  $region2: #{_lambda_.33} parent=0 // pred_check
    _
  $region3: #{_lambda_.33} parent=0 // pred_check_branch
    %9 = sbr.rel (0) target = $region5
  $region4: #{_lambda_.33} parent=0 // pred_region
    _
  $region5: #{_lambda_.33} parent=0 // pred_fallthru
    _
  // Predicated region
  $region6: #{_lambda_.33} parent=0 // pred_check
    _
  $region7: #{_lambda_.33} parent=0 // pred_check_branch
    %11 = sbr.rel (0) target = $region9
  $region8: #{_lambda_.33} parent=0 // pred_region
    _
  $region9: #{_lambda_.33} parent=0 // pred_fallthru
    _
  // Predicated region
  $region10: #{_lambda_.33} parent=0 // pred_check
    _
  $region11: #{_lambda_.33} parent=0 // pred_check_branch
    %13 = sbr.rel (0) target = $region13
  $region12: #{_lambda_.33} parent=0 // pred_region
    _
  $region13: #{_lambda_.33} parent=0 // pred_fallthru
    _
  %v15 = vld [vmem:[%s0] sm:$0xf]
  %v16 = vld [vmem:[%s1] sm:$0xf]
  %v17 = vld [vmem:[%s1 + $0x4] sm:$0xf]
  %v18 = vld [vmem:[%s1 + $0x8] sm:$0xf]
  %v19 = vld [vmem:[%s1 + $0xc] sm:$0xf]
  %v20 = vld [vmem:[%s2] sm:$0x1]
  %v22 = vperm.slane %v20, 0
  %v28 = vunpack.c.l.b16 %v16
  %v29 = vunpack.c.l.b16 %v17
  %v30 = vunpack.c.l.b16 %v18
  %v31 = vunpack.c.l.b16 %v19
  %v32 = vpack.c.b16 %v29, %v28
  %v33 = vpack.c.b16 %v31, %v30
  %vm36 = vcmask 261120
  %v38 = vsel %vm36, %v15, 0
  %40 = vmatpush.bf16.msra.mxu0 0
  %41 = vmatpush.bf16.msra.mxu0 0
  %42 = vmatpush.bf16.msra.mxu0 0
  %43 = vmatpush.bf16.msra.mxu0 0
  %44 = vmatpush.bf16.msra.mxu0 0
  %45 = vmatpush.bf16.msra.mxu0 0
  %46 = vmatpush.bf16.msra.mxu0 %v33
  %47 = vmatpush.bf16.msra.mxu0 %v32
  %48 = vmatmul.bf16.gmra.mxu0 %v38
  %v49 = vpop.f32.mrf.mxu0
  %v50 = vadd.f32 %v22, %v49
  %v51 = vpop.f32.mrf.mxu0
  %52 = vdwg.mxu0
  %53 = vst [vmem:[%s3] sm:$0xff] %v50
  // Predicated region
  $region14: #{_lambda_.33} parent=0 // pred_check
    _
  $region15: #{_lambda_.33} parent=0 // pred_check_branch
    %55 = sbr.rel (0) target = $region17
  $region16: #{_lambda_.33} parent=0 // pred_region
    _
  $region17: #{_lambda_.33} parent=0 // pred_fallthru
    _
  // Predicated region
  $region18: #{_lambda_.33} parent=0 // pred_check
    _
  $region19: #{_lambda_.33} parent=0 // pred_check_branch
    %57 = sbr.rel (0) target = $region21
  $region20: #{_lambda_.33} parent=0 // pred_region
    _
  $region21: #{_lambda_.33} parent=0 // pred_fallthru
    _

</llo_original>
